<compile_context>
chip_gen: v7x
topology: tpu7x:2x2x1
jax: 0.10.0
libtpu: 0.0.40
codegen_flags: <defaults>
</compile_context>

<pallas_src>
import functools
import math

import jax
import jax.numpy as jnp
import numpy as np
from jax.experimental import pallas as pl
from jax.experimental.pallas import tpu as pltpu

# ---- "parameters" (nn.Parameter init values; forward-only -> compile consts) ----
SIGMA_X = 0.5
SIGMA_Y = 0.5
SIGMA_Z = 0.5            # depth == 1, so z never contributes beyond offset 0
COLOR_SIGMA = 0.01
N_LAYERS = 3             # BilateralFilterLayer default path (opt.n_layers != 5)

INV2SX = 1.0 / (2.0 * SIGMA_X * SIGMA_X)
INV2SY = 1.0 / (2.0 * SIGMA_Y * SIGMA_Y)
INV2SC = 1.0 / (2.0 * COLOR_SIGMA * COLOR_SIGMA)
SQRT_INV2SC = math.sqrt(INV2SC)

RADIUS = max(1, int(math.ceil(5.0 * SIGMA_X)))   # reference spatial half-window

# Prune taps whose spatial weight is negligible (|d|=3 ring: exp(-18) ~ 1.5e-8
# for sigma=0.5).  The pure-JAX reference keeps the full RADIUS window, so the
# final assert also validates the pruning.
_PRUNE_EPS = 1e-7
KERNEL_RADIUS = RADIUS
while KERNEL_RADIUS > 1 and math.exp(
        -(KERNEL_RADIUS ** 2) * (INV2SX + INV2SY)) < _PRUNE_EPS:
    KERNEL_RADIUS -= 1

# Log-domain sentinel for masked (out-of-bounds) column taps: exp underflows to
# exactly 0.  Kept moderate so arg never strays far beyond magnitudes the exp
# path already sees from valid taps (|arg| up to ~1e6, nowhere near int range
# reduction limits).
NEG_MASK = -1.0e6

# Wrapper packing knobs.
_TARGET_LANES = 512                 # per-grid-step lane width target
_MAX_BASE_LANES = 1024              # above this, abandon lcm(128, W) packing
_BLOCK_IN_BYTES_BUDGET = 2 * 1024 * 1024   # cap on a single f32 input block


def _tree_sum(parts):
    """Pairwise (tree) sum of a list of arrays -> shorter dependency chains."""
    while len(parts) > 1:
        nxt = [parts[i] + parts[i + 1] for i in range(0, len(parts) - 1, 2)]
        if len(parts) % 2:
            nxt.append(parts[-1])
        parts = nxt
    return parts[0]


# ------------------------------- Pallas kernel -------------------------------
def wavelet_bilateral_kernel(x_ref, o_ref, *, H, W, Wp):
    """One lane-dense (H, bw) block of side-by-side packed images."""
    # Colour-sigma-scaled domain: range kernel becomes exp(-(s_i - s_j)^2).
    s = x_ref[...].astype(jnp.float32) * np.float32(SQRT_INV2SC)
    BW = s.shape[1]

    rows = jax.lax.broadcasted_iota(jnp.int32, (H, 1), 0)
    # bw is a multiple of Wp by construction, so lane % Wp is the per-image
    # local column regardless of which grid block this is.
    cols = jax.lax.broadcasted_iota(jnp.int32, (1, BW), 1) % Wp

    offs = list(range(-KERNEL_RADIUS, KERNEL_RADIUS + 1))

    # Hoisted out of the layer AND tap loops (JAX does not CSE broadcasts):
    #   row_w[dy]     : (H,1)  y-Gaussian x row-validity, applied once per dy.
    #   log_col_w[dx] : (1,BW) log(x-Gaussian), NEG_MASK on invalid columns
    #                   (masked taps -> exp underflows to 0); it also supplies
    #                   the minus sign of the range term: arg = log_col_w - d^2.
    row_w = {dy: jnp.where((rows + dy >= 0) & (rows + dy < H),
                           np.float32(math.exp(-(dy * dy) * INV2SY)),
                           np.float32(0.0))
             for dy in offs}

    def _log_col(dx):
        if dx == 0:
            # Centre column is always a valid neighbour of itself; keeping it
            # unmasked guarantees den >= 1 everywhere (incl. padding lanes).
            return jnp.zeros((1, BW), jnp.float32)
        return jnp.where((cols + dx >= 0) & (cols + dx < W),
                         np.float32(-(dx * dx) * INV2SX),
                         np.float32(NEG_MASK))

    log_col_w = {dx: _log_col(dx) for dx in offs}

    def roll(v, shift, axis):
        # jnp.roll semantics; pltpu.roll gets a non-negative static amount and
        # lowers to an XLU rotate (no slice+concat VMEM copies).
        amt = shift % v.shape[axis]
        return v if amt == 0 else pltpu.roll(v, amt, axis)

    for _ in range(N_LAYERS):                 # BF_img_1 -> BF_img_2 -> BF_img_3
        # Per-dy partial accumulators: 5 independent num/den chains (ILP across
        # the unrolled taps), tree-summed afterwards.
        num_parts, den_parts = [], []
        for dy in offs:
            srow = roll(s, -dy, 0)            # one sublane rotate per dy (XLU)
            num_dy = None
            den_dy = None
            for dx in offs:
                sh = srow if dx == 0 else roll(srow, -dx, 1)   # lane rotate
                d = s - sh
                w = jnp.exp(log_col_w[dx] - d * d)             # EUP
                ws = w * sh
                if num_dy is None:
                    num_dy, den_dy = ws, w
                else:
                    num_dy, den_dy = num_dy + ws, den_dy + w
            num_parts.append(row_w[dy] * num_dy)
            den_parts.append(row_w[dy] * den_dy)
        num = _tree_sum(num_parts)
        den = _tree_sum(den_parts)
        # Centre tap contributes weight exactly 1 -> den >= 1 (no div-by-zero,
        # also on phantom padding lanes).  approx=False: runs only N_LAYERS
        # times per pixel, keeps full margin vs the 1e-4 reference tolerance.
        s = num * pl.reciprocal(den, approx=False)

    o_ref[...] = (s * np.float32(1.0 / SQRT_INV2SC)).astype(o_ref.dtype)


# --------------------------------- wrapper -----------------------------------
def wavelet_bilateral(x):
    """x: [B, 7, H, W] float32 -> [B, 7, H, W, 1] (matches the torch output)."""
    B, C, H, W = x.shape
    assert C == 7, "WaveletBilateral expects 7 wavelet channels"
    N = B * C
    cdiv = lambda a, b: -(-a // b)

    # ---- bounded, lane-dense packing geometry ----
    lcm_w = (128 * W) // math.gcd(128, W)
    if lcm_w <= _MAX_BASE_LANES:
        Wp, base = W, lcm_w                  # dense: zero per-image lane waste
    else:
        Wp = cdiv(W, 128) * 128              # bound block width for awkward W
        base = Wp                            # (column mask kills the padding)

    k = max(1, _TARGET_LANES // base)        # amortize per-grid-step overhead
    while k > 1 and H * k * base * 4 > _BLOCK_IN_BYTES_BUDGET:
        k -= 1                               # keep per-block VMEM bounded
    while k > 1 and cdiv(N * Wp, k * base) < 2:
        k -= 1                               # keep >= 2 blocks (megacore)
    bw = k * base
    num_blocks = max(1, cdiv(N * Wp, bw))

    cap = bw // Wp                           # image slots per block
    n_slots = num_blocks * cap

    # ---- pack: pad columns to Wp, pad image count to n_slots, interleave the
    # phantom images across blocks (balanced load), lay out lane-dense. ----
    imgs = x.reshape(N, H, W).astype(jnp.float32)
    if Wp != W:
        imgs = jnp.pad(imgs, ((0, 0), (0, 0), (0, Wp - W)))
    if n_slots != N:
        imgs = jnp.pad(imgs, ((0, n_slots - N), (0, 0), (0, 0)))
    # slot (block b, position j) holds image j*num_blocks + b, so the phantoms
    # (largest indices) land at the tail of EVERY block, not all in the last.
    imgs = imgs.reshape(cap, num_blocks, H, Wp).transpose(1, 0, 2, 3)
    packed = imgs.transpose(2, 0, 1, 3).reshape(H, n_slots * Wp)

    taps = (2 * KERNEL_RADIUS + 1) ** 2
    n_pix = H * n_slots * Wp
    cost = pl.CostEstimate(
        flops=int(n_pix * N_LAYERS * (7 * taps + 8)),
        transcendentals=int(n_pix * N_LAYERS * (taps + 1)),
        bytes_accessed=int(2 * n_pix * 4),
    )

    block_bytes = H * bw * 4
    vmem_limit = int(min(100 * 2**20, max(8 * 2**20, 32 * block_bytes)))

    kern = functools.partial(wavelet_bilateral_kernel, H=H, W=W, Wp=Wp)
    out = pl.pallas_call(
        kern,
        out_shape=jax.ShapeDtypeStruct((H, n_slots * Wp), jnp.float32),
        grid_spec=pltpu.PrefetchScalarGridSpec(
            num_scalar_prefetch=0,
            grid=(num_blocks,),
            in_specs=[pl.BlockSpec((H, bw), lambda i: (0, i))],
            out_specs=pl.BlockSpec((H, bw), lambda i: (0, i)),
        ),
        compiler_params=pltpu.CompilerParams(
            dimension_semantics=("parallel",),
            vmem_limit_bytes=vmem_limit),
        cost_estimate=cost,
    )(packed)

    # ---- unpack: undo lane packing, the interleave and all padding ----
    out = out.reshape(H, num_blocks, cap, Wp).transpose(2, 1, 0, 3)
    out = out.reshape(n_slots, H, Wp)[:N, :, :W]
    out = out.reshape(B, C, H, W).astype(x.dtype)
    return out[..., None]                     # -> (B, C, H, W, 1)


# ----------------------------- pure-JAX reference -----------------------------
def _reference_pass(img, H, W):
    """Full (unpruned) RADIUS-window brute-force bilateral pass on (H, W)."""
    rows = jnp.arange(H, dtype=jnp.int32)[:, None]
    cols = jnp.arange(W, dtype=jnp.int32)[None, :]
    num = jnp.zeros_like(img)
    den = jnp.zeros_like(img)
    for dy in range(-RADIUS, RADIUS + 1):
        for dx in range(-RADIUS, RADIUS + 1):
            shifted = jnp.roll(jnp.roll(img, -dy, axis=0), -dx, axis=1)
            valid = ((rows + dy >= 0) & (rows + dy < H) &
                     (cols + dx >= 0) & (cols + dx < W))
            sw = math.exp(-(dy * dy) * INV2SY - (dx * dx) * INV2SX)
            diff = img - shifted
            w = jnp.where(valid, sw * jnp.exp(-(diff * diff) * INV2SC), 0.0)
            num = num + w * shifted
            den = den + w
    return num / den


def _reference(x):
    B, C, H, W = x.shape
    imgs = x.reshape(B * C, H, W).astype(jnp.float32)

    def per_image(img):
        for _ in range(N_LAYERS):
            img = _reference_pass(img, H, W)
        return img

    out = jax.vmap(per_image)(imgs)
    return out.reshape(B, C, H, W, 1).astype(x.dtype)


if __name__ == "__main__":
    key = jax.random.PRNGKey(0)
    B, C, H, W = 2, 7, 16, 16
    x = jax.random.normal(key, (B, C, H, W), dtype=jnp.float32)

    out = jax.block_until_ready(wavelet_bilateral(x))
    assert out.shape == (B, C, H, W, 1), out.shape

    ref = jax.block_until_ready(_reference(x))
    np.testing.assert_allclose(np.asarray(out), np.asarray(ref),
                               rtol=1e-4, atol=1e-4)

    print("KERNEL_OK")
</pallas_src>

<mosaic_0001>
module attributes {stable_mosaic.version = 11 : i64} {
  func.func @wavelet_bilateral_kernel(%arg0: i32, %arg1: memref<16x128xf32, #tpu.memory_space<vmem>>, %arg2: memref<16x128xf32, #tpu.memory_space<vmem>>) attributes {dimension_semantics = [#tpu.dimension_semantics<parallel>], iteration_bounds = array<i64: 2>, scalar_prefetch = 0 : i64, scratch_operands = 0 : i64, tpu.core_type = #tpu.core_type<tc>, window_params = [{transform_indices = @transform_0, window_bounds = array<i64: 16, 128>}, {transform_indices = @transform_1, window_bounds = array<i64: 16, 128>}]} {
    %c0 = arith.constant 0 : index
    %c0_0 = arith.constant 0 : index
    %0 = vector.load %arg1[%c0, %c0_0] : memref<16x128xf32, #tpu.memory_space<vmem>>, vector<16x128xf32>
    %cst = arith.constant 70.7106781 : f32
    %1 = vector.broadcast %cst : f32 to vector<16x128xf32>
    %2 = arith.mulf %0, %1 : vector<16x128xf32>
    %3 = tpu.iota {dimensions = array<i32: 0>} : vector<16x1xi32>
    %4 = tpu.iota {dimensions = array<i32: 1>} : vector<1x128xi32>
    %c16_i32 = arith.constant 16 : i32
    %c0_i32 = arith.constant 0 : i32
    %5 = arith.cmpi eq, %c16_i32, %c0_i32 : i32
    %c1_i32 = arith.constant 1 : i32
    %6 = arith.select %5, %c1_i32, %c16_i32 : i32
    %7 = vector.broadcast %6 : i32 to vector<1x128xi32>
    %8 = arith.remsi %4, %7 : vector<1x128xi32>
    %c0_i32_1 = arith.constant 0 : i32
    %9 = vector.broadcast %c0_i32_1 : i32 to vector<1x128xi32>
    %10 = arith.cmpi ne, %8, %9 : vector<1x128xi32>
    %c0_i32_2 = arith.constant 0 : i32
    %11 = vector.broadcast %c0_i32_2 : i32 to vector<1x128xi32>
    %12 = arith.cmpi slt, %8, %11 : vector<1x128xi32>
    %c0_i32_3 = arith.constant 0 : i32
    %13 = arith.cmpi slt, %6, %c0_i32_3 : i32
    %14 = vector.broadcast %13 : i1 to vector<1x128xi1>
    %15 = vector.broadcast %14 : vector<1x128xi1> to vector<1x128xi1>
    %16 = arith.xori %12, %15 : vector<1x128xi1>
    %17 = arith.andi %16, %10 : vector<1x128xi1>
    %18 = vector.broadcast %6 : i32 to vector<1x128xi32>
    %19 = arith.addi %8, %18 : vector<1x128xi32>
    %20 = arith.select %17, %19, %8 : vector<1x128xi1>, vector<1x128xi32>
    %c-2_i32 = arith.constant -2 : i32
    %21 = vector.broadcast %c-2_i32 : i32 to vector<16x1xi32>
    %22 = arith.addi %3, %21 : vector<16x1xi32>
    %c0_i32_4 = arith.constant 0 : i32
    %23 = vector.broadcast %c0_i32_4 : i32 to vector<16x1xi32>
    %24 = arith.cmpi sge, %22, %23 : vector<16x1xi32>
    %c-2_i32_5 = arith.constant -2 : i32
    %25 = vector.broadcast %c-2_i32_5 : i32 to vector<16x1xi32>
    %26 = arith.addi %3, %25 : vector<16x1xi32>
    %c16_i32_6 = arith.constant 16 : i32
    %27 = vector.broadcast %c16_i32_6 : i32 to vector<16x1xi32>
    %28 = arith.cmpi slt, %26, %27 : vector<16x1xi32>
    %29 = arith.andi %24, %28 : vector<16x1xi1>
    %cst_7 = arith.constant 3.35462624E-4 : f32
    %cst_8 = arith.constant 0.000000e+00 : f32
    %30 = vector.broadcast %cst_7 : f32 to vector<16x1xf32>
    %31 = vector.broadcast %cst_8 : f32 to vector<16x1xf32>
    %32 = arith.select %29, %30, %31 : vector<16x1xi1>, vector<16x1xf32>
    %c-1_i32 = arith.constant -1 : i32
    %33 = vector.broadcast %c-1_i32 : i32 to vector<16x1xi32>
    %34 = arith.addi %3, %33 : vector<16x1xi32>
    %c0_i32_9 = arith.constant 0 : i32
    %35 = vector.broadcast %c0_i32_9 : i32 to vector<16x1xi32>
    %36 = arith.cmpi sge, %34, %35 : vector<16x1xi32>
    %c-1_i32_10 = arith.constant -1 : i32
    %37 = vector.broadcast %c-1_i32_10 : i32 to vector<16x1xi32>
    %38 = arith.addi %3, %37 : vector<16x1xi32>
    %c16_i32_11 = arith.constant 16 : i32
    %39 = vector.broadcast %c16_i32_11 : i32 to vector<16x1xi32>
    %40 = arith.cmpi slt, %38, %39 : vector<16x1xi32>
    %41 = arith.andi %36, %40 : vector<16x1xi1>
    %cst_12 = arith.constant 0.135335281 : f32
    %cst_13 = arith.constant 0.000000e+00 : f32
    %42 = vector.broadcast %cst_12 : f32 to vector<16x1xf32>
    %43 = vector.broadcast %cst_13 : f32 to vector<16x1xf32>
    %44 = arith.select %41, %42, %43 : vector<16x1xi1>, vector<16x1xf32>
    %c0_i32_14 = arith.constant 0 : i32
    %45 = vector.broadcast %c0_i32_14 : i32 to vector<16x1xi32>
    %46 = arith.addi %3, %45 : vector<16x1xi32>
    %c0_i32_15 = arith.constant 0 : i32
    %47 = vector.broadcast %c0_i32_15 : i32 to vector<16x1xi32>
    %48 = arith.cmpi sge, %46, %47 : vector<16x1xi32>
    %c0_i32_16 = arith.constant 0 : i32
    %49 = vector.broadcast %c0_i32_16 : i32 to vector<16x1xi32>
    %50 = arith.addi %3, %49 : vector<16x1xi32>
    %c16_i32_17 = arith.constant 16 : i32
    %51 = vector.broadcast %c16_i32_17 : i32 to vector<16x1xi32>
    %52 = arith.cmpi slt, %50, %51 : vector<16x1xi32>
    %53 = arith.andi %48, %52 : vector<16x1xi1>
    %cst_18 = arith.constant 1.000000e+00 : f32
    %cst_19 = arith.constant 0.000000e+00 : f32
    %54 = vector.broadcast %cst_18 : f32 to vector<16x1xf32>
    %55 = vector.broadcast %cst_19 : f32 to vector<16x1xf32>
    %56 = arith.select %53, %54, %55 : vector<16x1xi1>, vector<16x1xf32>
    %c1_i32_20 = arith.constant 1 : i32
    %57 = vector.broadcast %c1_i32_20 : i32 to vector<16x1xi32>
    %58 = arith.addi %3, %57 : vector<16x1xi32>
    %c0_i32_21 = arith.constant 0 : i32
    %59 = vector.broadcast %c0_i32_21 : i32 to vector<16x1xi32>
    %60 = arith.cmpi sge, %58, %59 : vector<16x1xi32>
    %c1_i32_22 = arith.constant 1 : i32
    %61 = vector.broadcast %c1_i32_22 : i32 to vector<16x1xi32>
    %62 = arith.addi %3, %61 : vector<16x1xi32>
    %c16_i32_23 = arith.constant 16 : i32
    %63 = vector.broadcast %c16_i32_23 : i32 to vector<16x1xi32>
    %64 = arith.cmpi slt, %62, %63 : vector<16x1xi32>
    %65 = arith.andi %60, %64 : vector<16x1xi1>
    %cst_24 = arith.constant 0.135335281 : f32
    %cst_25 = arith.constant 0.000000e+00 : f32
    %66 = vector.broadcast %cst_24 : f32 to vector<16x1xf32>
    %67 = vector.broadcast %cst_25 : f32 to vector<16x1xf32>
    %68 = arith.select %65, %66, %67 : vector<16x1xi1>, vector<16x1xf32>
    %c2_i32 = arith.constant 2 : i32
    %69 = vector.broadcast %c2_i32 : i32 to vector<16x1xi32>
    %70 = arith.addi %3, %69 : vector<16x1xi32>
    %c0_i32_26 = arith.constant 0 : i32
    %71 = vector.broadcast %c0_i32_26 : i32 to vector<16x1xi32>
    %72 = arith.cmpi sge, %70, %71 : vector<16x1xi32>
    %c2_i32_27 = arith.constant 2 : i32
    %73 = vector.broadcast %c2_i32_27 : i32 to vector<16x1xi32>
    %74 = arith.addi %3, %73 : vector<16x1xi32>
    %c16_i32_28 = arith.constant 16 : i32
    %75 = vector.broadcast %c16_i32_28 : i32 to vector<16x1xi32>
    %76 = arith.cmpi slt, %74, %75 : vector<16x1xi32>
    %77 = arith.andi %72, %76 : vector<16x1xi1>
    %cst_29 = arith.constant 3.35462624E-4 : f32
    %cst_30 = arith.constant 0.000000e+00 : f32
    %78 = vector.broadcast %cst_29 : f32 to vector<16x1xf32>
    %79 = vector.broadcast %cst_30 : f32 to vector<16x1xf32>
    %80 = arith.select %77, %78, %79 : vector<16x1xi1>, vector<16x1xf32>
    %c-2_i32_31 = arith.constant -2 : i32
    %81 = vector.broadcast %c-2_i32_31 : i32 to vector<1x128xi32>
    %82 = arith.addi %20, %81 : vector<1x128xi32>
    %c0_i32_32 = arith.constant 0 : i32
    %83 = vector.broadcast %c0_i32_32 : i32 to vector<1x128xi32>
    %84 = arith.cmpi sge, %82, %83 : vector<1x128xi32>
    %c-2_i32_33 = arith.constant -2 : i32
    %85 = vector.broadcast %c-2_i32_33 : i32 to vector<1x128xi32>
    %86 = arith.addi %20, %85 : vector<1x128xi32>
    %c16_i32_34 = arith.constant 16 : i32
    %87 = vector.broadcast %c16_i32_34 : i32 to vector<1x128xi32>
    %88 = arith.cmpi slt, %86, %87 : vector<1x128xi32>
    %89 = arith.andi %84, %88 : vector<1x128xi1>
    %cst_35 = arith.constant -8.000000e+00 : f32
    %cst_36 = arith.constant -1.000000e+06 : f32
    %90 = vector.broadcast %cst_35 : f32 to vector<1x128xf32>
    %91 = vector.broadcast %cst_36 : f32 to vector<1x128xf32>
    %92 = arith.select %89, %90, %91 : vector<1x128xi1>, vector<1x128xf32>
    %c-1_i32_37 = arith.constant -1 : i32
    %93 = vector.broadcast %c-1_i32_37 : i32 to vector<1x128xi32>
    %94 = arith.addi %20, %93 : vector<1x128xi32>
    %c0_i32_38 = arith.constant 0 : i32
    %95 = vector.broadcast %c0_i32_38 : i32 to vector<1x128xi32>
    %96 = arith.cmpi sge, %94, %95 : vector<1x128xi32>
    %c-1_i32_39 = arith.constant -1 : i32
    %97 = vector.broadcast %c-1_i32_39 : i32 to vector<1x128xi32>
    %98 = arith.addi %20, %97 : vector<1x128xi32>
    %c16_i32_40 = arith.constant 16 : i32
    %99 = vector.broadcast %c16_i32_40 : i32 to vector<1x128xi32>
    %100 = arith.cmpi slt, %98, %99 : vector<1x128xi32>
    %101 = arith.andi %96, %100 : vector<1x128xi1>
    %cst_41 = arith.constant -2.000000e+00 : f32
    %cst_42 = arith.constant -1.000000e+06 : f32
    %102 = vector.broadcast %cst_41 : f32 to vector<1x128xf32>
    %103 = vector.broadcast %cst_42 : f32 to vector<1x128xf32>
    %104 = arith.select %101, %102, %103 : vector<1x128xi1>, vector<1x128xf32>
    %cst_43 = arith.constant 0.000000e+00 : f32
    %105 = vector.broadcast %cst_43 : f32 to vector<1x128xf32>
    %c1_i32_44 = arith.constant 1 : i32
    %106 = vector.broadcast %c1_i32_44 : i32 to vector<1x128xi32>
    %107 = arith.addi %20, %106 : vector<1x128xi32>
    %c0_i32_45 = arith.constant 0 : i32
    %108 = vector.broadcast %c0_i32_45 : i32 to vector<1x128xi32>
    %109 = arith.cmpi sge, %107, %108 : vector<1x128xi32>
    %c1_i32_46 = arith.constant 1 : i32
    %110 = vector.broadcast %c1_i32_46 : i32 to vector<1x128xi32>
    %111 = arith.addi %20, %110 : vector<1x128xi32>
    %c16_i32_47 = arith.constant 16 : i32
    %112 = vector.broadcast %c16_i32_47 : i32 to vector<1x128xi32>
    %113 = arith.cmpi slt, %111, %112 : vector<1x128xi32>
    %114 = arith.andi %109, %113 : vector<1x128xi1>
    %cst_48 = arith.constant -2.000000e+00 : f32
    %cst_49 = arith.constant -1.000000e+06 : f32
    %115 = vector.broadcast %cst_48 : f32 to vector<1x128xf32>
    %116 = vector.broadcast %cst_49 : f32 to vector<1x128xf32>
    %117 = arith.select %114, %115, %116 : vector<1x128xi1>, vector<1x128xf32>
    %c2_i32_50 = arith.constant 2 : i32
    %118 = vector.broadcast %c2_i32_50 : i32 to vector<1x128xi32>
    %119 = arith.addi %20, %118 : vector<1x128xi32>
    %c0_i32_51 = arith.constant 0 : i32
    %120 = vector.broadcast %c0_i32_51 : i32 to vector<1x128xi32>
    %121 = arith.cmpi sge, %119, %120 : vector<1x128xi32>
    %c2_i32_52 = arith.constant 2 : i32
    %122 = vector.broadcast %c2_i32_52 : i32 to vector<1x128xi32>
    %123 = arith.addi %20, %122 : vector<1x128xi32>
    %c16_i32_53 = arith.constant 16 : i32
    %124 = vector.broadcast %c16_i32_53 : i32 to vector<1x128xi32>
    %125 = arith.cmpi slt, %123, %124 : vector<1x128xi32>
    %126 = arith.andi %121, %125 : vector<1x128xi1>
    %cst_54 = arith.constant -8.000000e+00 : f32
    %cst_55 = arith.constant -1.000000e+06 : f32
    %127 = vector.broadcast %cst_54 : f32 to vector<1x128xf32>
    %128 = vector.broadcast %cst_55 : f32 to vector<1x128xf32>
    %129 = arith.select %126, %127, %128 : vector<1x128xi1>, vector<1x128xf32>
    %c2_i32_56 = arith.constant 2 : i32
    %130 = tpu.dynamic_rotate %2 by %c2_i32_56 dim 0 : vector<16x128xf32>, i32 -> vector<16x128xf32>
    %c2_i32_57 = arith.constant 2 : i32
    %131 = tpu.dynamic_rotate %130 by %c2_i32_57 dim 1 : vector<16x128xf32>, i32 -> vector<16x128xf32>
    %132 = arith.subf %2, %131 : vector<16x128xf32>
    %133 = arith.mulf %132, %132 : vector<16x128xf32>
    %134 = vector.broadcast %92 : vector<1x128xf32> to vector<16x128xf32>
    %135 = arith.subf %134, %133 : vector<16x128xf32>
    %136 = math.exp %135 : vector<16x128xf32>
    %137 = arith.mulf %136, %131 : vector<16x128xf32>
    %c1_i32_58 = arith.constant 1 : i32
    %138 = tpu.dynamic_rotate %130 by %c1_i32_58 dim 1 : vector<16x128xf32>, i32 -> vector<16x128xf32>
    %139 = arith.subf %2, %138 : vector<16x128xf32>
    %140 = arith.mulf %139, %139 : vector<16x128xf32>
    %141 = vector.broadcast %104 : vector<1x128xf32> to vector<16x128xf32>
    %142 = arith.subf %141, %140 : vector<16x128xf32>
    %143 = math.exp %142 : vector<16x128xf32>
    %144 = arith.mulf %143, %138 : vector<16x128xf32>
    %145 = arith.addf %137, %144 : vector<16x128xf32>
    %146 = arith.addf %136, %143 : vector<16x128xf32>
    %147 = arith.subf %2, %130 : vector<16x128xf32>
    %148 = arith.mulf %147, %147 : vector<16x128xf32>
    %149 = vector.broadcast %105 : vector<1x128xf32> to vector<16x128xf32>
    %150 = arith.subf %149, %148 : vector<16x128xf32>
    %151 = math.exp %150 : vector<16x128xf32>
    %152 = arith.mulf %151, %130 : vector<16x128xf32>
    %153 = arith.addf %145, %152 : vector<16x128xf32>
    %154 = arith.addf %146, %151 : vector<16x128xf32>
    %c127_i32 = arith.constant 127 : i32
    %155 = tpu.dynamic_rotate %130 by %c127_i32 dim 1 : vector<16x128xf32>, i32 -> vector<16x128xf32>
    %156 = arith.subf %2, %155 : vector<16x128xf32>
    %157 = arith.mulf %156, %156 : vector<16x128xf32>
    %158 = vector.broadcast %117 : vector<1x128xf32> to vector<16x128xf32>
    %159 = arith.subf %158, %157 : vector<16x128xf32>
    %160 = math.exp %159 : vector<16x128xf32>
    %161 = arith.mulf %160, %155 : vector<16x128xf32>
    %162 = arith.addf %153, %161 : vector<16x128xf32>
    %163 = arith.addf %154, %160 : vector<16x128xf32>
    %c126_i32 = arith.constant 126 : i32
    %164 = tpu.dynamic_rotate %130 by %c126_i32 dim 1 : vector<16x128xf32>, i32 -> vector<16x128xf32>
    %165 = arith.subf %2, %164 : vector<16x128xf32>
    %166 = arith.mulf %165, %165 : vector<16x128xf32>
    %167 = vector.broadcast %129 : vector<1x128xf32> to vector<16x128xf32>
    %168 = arith.subf %167, %166 : vector<16x128xf32>
    %169 = math.exp %168 : vector<16x128xf32>
    %170 = arith.mulf %169, %164 : vector<16x128xf32>
    %171 = arith.addf %162, %170 : vector<16x128xf32>
    %172 = arith.addf %163, %169 : vector<16x128xf32>
    %173 = vector.broadcast %32 : vector<16x1xf32> to vector<16x128xf32>
    %174 = arith.mulf %173, %171 : vector<16x128xf32>
    %175 = vector.broadcast %32 : vector<16x1xf32> to vector<16x128xf32>
    %176 = arith.mulf %175, %172 : vector<16x128xf32>
    %c1_i32_59 = arith.constant 1 : i32
    %177 = tpu.dynamic_rotate %2 by %c1_i32_59 dim 0 : vector<16x128xf32>, i32 -> vector<16x128xf32>
    %c2_i32_60 = arith.constant 2 : i32
    %178 = tpu.dynamic_rotate %177 by %c2_i32_60 dim 1 : vector<16x128xf32>, i32 -> vector<16x128xf32>
    %179 = arith.subf %2, %178 : vector<16x128xf32>
    %180 = arith.mulf %179, %179 : vector<16x128xf32>
    %181 = vector.broadcast %92 : vector<1x128xf32> to vector<16x128xf32>
    %182 = arith.subf %181, %180 : vector<16x128xf32>
    %183 = math.exp %182 : vector<16x128xf32>
    %184 = arith.mulf %183, %178 : vector<16x128xf32>
    %c1_i32_61 = arith.constant 1 : i32
    %185 = tpu.dynamic_rotate %177 by %c1_i32_61 dim 1 : vector<16x128xf32>, i32 -> vector<16x128xf32>
    %186 = arith.subf %2, %185 : vector<16x128xf32>
    %187 = arith.mulf %186, %186 : vector<16x128xf32>
    %188 = vector.broadcast %104 : vector<1x128xf32> to vector<16x128xf32>
    %189 = arith.subf %188, %187 : vector<16x128xf32>
    %190 = math.exp %189 : vector<16x128xf32>
    %191 = arith.mulf %190, %185 : vector<16x128xf32>
    %192 = arith.addf %184, %191 : vector<16x128xf32>
    %193 = arith.addf %183, %190 : vector<16x128xf32>
    %194 = arith.subf %2, %177 : vector<16x128xf32>
    %195 = arith.mulf %194, %194 : vector<16x128xf32>
    %196 = vector.broadcast %105 : vector<1x128xf32> to vector<16x128xf32>
    %197 = arith.subf %196, %195 : vector<16x128xf32>
    %198 = math.exp %197 : vector<16x128xf32>
    %199 = arith.mulf %198, %177 : vector<16x128xf32>
    %200 = arith.addf %192, %199 : vector<16x128xf32>
    %201 = arith.addf %193, %198 : vector<16x128xf32>
    %c127_i32_62 = arith.constant 127 : i32
    %202 = tpu.dynamic_rotate %177 by %c127_i32_62 dim 1 : vector<16x128xf32>, i32 -> vector<16x128xf32>
    %203 = arith.subf %2, %202 : vector<16x128xf32>
    %204 = arith.mulf %203, %203 : vector<16x128xf32>
    %205 = vector.broadcast %117 : vector<1x128xf32> to vector<16x128xf32>
    %206 = arith.subf %205, %204 : vector<16x128xf32>
    %207 = math.exp %206 : vector<16x128xf32>
    %208 = arith.mulf %207, %202 : vector<16x128xf32>
    %209 = arith.addf %200, %208 : vector<16x128xf32>
    %210 = arith.addf %201, %207 : vector<16x128xf32>
    %c126_i32_63 = arith.constant 126 : i32
    %211 = tpu.dynamic_rotate %177 by %c126_i32_63 dim 1 : vector<16x128xf32>, i32 -> vector<16x128xf32>
    %212 = arith.subf %2, %211 : vector<16x128xf32>
    %213 = arith.mulf %212, %212 : vector<16x128xf32>
    %214 = vector.broadcast %129 : vector<1x128xf32> to vector<16x128xf32>
    %215 = arith.subf %214, %213 : vector<16x128xf32>
    %216 = math.exp %215 : vector<16x128xf32>
    %217 = arith.mulf %216, %211 : vector<16x128xf32>
    %218 = arith.addf %209, %217 : vector<16x128xf32>
    %219 = arith.addf %210, %216 : vector<16x128xf32>
    %220 = vector.broadcast %44 : vector<16x1xf32> to vector<16x128xf32>
    %221 = arith.mulf %220, %218 : vector<16x128xf32>
    %222 = vector.broadcast %44 : vector<16x1xf32> to vector<16x128xf32>
    %223 = arith.mulf %222, %219 : vector<16x128xf32>
    %c2_i32_64 = arith.constant 2 : i32
    %224 = tpu.dynamic_rotate %2 by %c2_i32_64 dim 1 : vector<16x128xf32>, i32 -> vector<16x128xf32>
    %225 = arith.subf %2, %224 : vector<16x128xf32>
    %226 = arith.mulf %225, %225 : vector<16x128xf32>
    %227 = vector.broadcast %92 : vector<1x128xf32> to vector<16x128xf32>
    %228 = arith.subf %227, %226 : vector<16x128xf32>
    %229 = math.exp %228 : vector<16x128xf32>
    %230 = arith.mulf %229, %224 : vector<16x128xf32>
    %c1_i32_65 = arith.constant 1 : i32
    %231 = tpu.dynamic_rotate %2 by %c1_i32_65 dim 1 : vector<16x128xf32>, i32 -> vector<16x128xf32>
    %232 = arith.subf %2, %231 : vector<16x128xf32>
    %233 = arith.mulf %232, %232 : vector<16x128xf32>
    %234 = vector.broadcast %104 : vector<1x128xf32> to vector<16x128xf32>
    %235 = arith.subf %234, %233 : vector<16x128xf32>
    %236 = math.exp %235 : vector<16x128xf32>
    %237 = arith.mulf %236, %231 : vector<16x128xf32>
    %238 = arith.addf %230, %237 : vector<16x128xf32>
    %239 = arith.addf %229, %236 : vector<16x128xf32>
    %240 = arith.subf %2, %2 : vector<16x128xf32>
    %241 = arith.mulf %240, %240 : vector<16x128xf32>
    %242 = vector.broadcast %105 : vector<1x128xf32> to vector<16x128xf32>
    %243 = arith.subf %242, %241 : vector<16x128xf32>
    %244 = math.exp %243 : vector<16x128xf32>
    %245 = arith.mulf %244, %2 : vector<16x128xf32>
    %246 = arith.addf %238, %245 : vector<16x128xf32>
    %247 = arith.addf %239, %244 : vector<16x128xf32>
    %c127_i32_66 = arith.constant 127 : i32
    %248 = tpu.dynamic_rotate %2 by %c127_i32_66 dim 1 : vector<16x128xf32>, i32 -> vector<16x128xf32>
    %249 = arith.subf %2, %248 : vector<16x128xf32>
    %250 = arith.mulf %249, %249 : vector<16x128xf32>
    %251 = vector.broadcast %117 : vector<1x128xf32> to vector<16x128xf32>
    %252 = arith.subf %251, %250 : vector<16x128xf32>
    %253 = math.exp %252 : vector<16x128xf32>
    %254 = arith.mulf %253, %248 : vector<16x128xf32>
    %255 = arith.addf %246, %254 : vector<16x128xf32>
    %256 = arith.addf %247, %253 : vector<16x128xf32>
    %c126_i32_67 = arith.constant 126 : i32
    %257 = tpu.dynamic_rotate %2 by %c126_i32_67 dim 1 : vector<16x128xf32>, i32 -> vector<16x128xf32>
    %258 = arith.subf %2, %257 : vector<16x128xf32>
    %259 = arith.mulf %258, %258 : vector<16x128xf32>
    %260 = vector.broadcast %129 : vector<1x128xf32> to vector<16x128xf32>
    %261 = arith.subf %260, %259 : vector<16x128xf32>
    %262 = math.exp %261 : vector<16x128xf32>
    %263 = arith.mulf %262, %257 : vector<16x128xf32>
    %264 = arith.addf %255, %263 : vector<16x128xf32>
    %265 = arith.addf %256, %262 : vector<16x128xf32>
    %266 = vector.broadcast %56 : vector<16x1xf32> to vector<16x128xf32>
    %267 = arith.mulf %266, %264 : vector<16x128xf32>
    %268 = vector.broadcast %56 : vector<16x1xf32> to vector<16x128xf32>
    %269 = arith.mulf %268, %265 : vector<16x128xf32>
    %c15_i32 = arith.constant 15 : i32
    %270 = tpu.dynamic_rotate %2 by %c15_i32 dim 0 : vector<16x128xf32>, i32 -> vector<16x128xf32>
    %c2_i32_68 = arith.constant 2 : i32
    %271 = tpu.dynamic_rotate %270 by %c2_i32_68 dim 1 : vector<16x128xf32>, i32 -> vector<16x128xf32>
    %272 = arith.subf %2, %271 : vector<16x128xf32>
    %273 = arith.mulf %272, %272 : vector<16x128xf32>
    %274 = vector.broadcast %92 : vector<1x128xf32> to vector<16x128xf32>
    %275 = arith.subf %274, %273 : vector<16x128xf32>
    %276 = math.exp %275 : vector<16x128xf32>
    %277 = arith.mulf %276, %271 : vector<16x128xf32>
    %c1_i32_69 = arith.constant 1 : i32
    %278 = tpu.dynamic_rotate %270 by %c1_i32_69 dim 1 : vector<16x128xf32>, i32 -> vector<16x128xf32>
    %279 = arith.subf %2, %278 : vector<16x128xf32>
    %280 = arith.mulf %279, %279 : vector<16x128xf32>
    %281 = vector.broadcast %104 : vector<1x128xf32> to vector<16x128xf32>
    %282 = arith.subf %281, %280 : vector<16x128xf32>
    %283 = math.exp %282 : vector<16x128xf32>
    %284 = arith.mulf %283, %278 : vector<16x128xf32>
    %285 = arith.addf %277, %284 : vector<16x128xf32>
    %286 = arith.addf %276, %283 : vector<16x128xf32>
    %287 = arith.subf %2, %270 : vector<16x128xf32>
    %288 = arith.mulf %287, %287 : vector<16x128xf32>
    %289 = vector.broadcast %105 : vector<1x128xf32> to vector<16x128xf32>
    %290 = arith.subf %289, %288 : vector<16x128xf32>
    %291 = math.exp %290 : vector<16x128xf32>
    %292 = arith.mulf %291, %270 : vector<16x128xf32>
    %293 = arith.addf %285, %292 : vector<16x128xf32>
    %294 = arith.addf %286, %291 : vector<16x128xf32>
    %c127_i32_70 = arith.constant 127 : i32
    %295 = tpu.dynamic_rotate %270 by %c127_i32_70 dim 1 : vector<16x128xf32>, i32 -> vector<16x128xf32>
    %296 = arith.subf %2, %295 : vector<16x128xf32>
    %297 = arith.mulf %296, %296 : vector<16x128xf32>
    %298 = vector.broadcast %117 : vector<1x128xf32> to vector<16x128xf32>
    %299 = arith.subf %298, %297 : vector<16x128xf32>
    %300 = math.exp %299 : vector<16x128xf32>
    %301 = arith.mulf %300, %295 : vector<16x128xf32>
    %302 = arith.addf %293, %301 : vector<16x128xf32>
    %303 = arith.addf %294, %300 : vector<16x128xf32>
    %c126_i32_71 = arith.constant 126 : i32
    %304 = tpu.dynamic_rotate %270 by %c126_i32_71 dim 1 : vector<16x128xf32>, i32 -> vector<16x128xf32>
    %305 = arith.subf %2, %304 : vector<16x128xf32>
    %306 = arith.mulf %305, %305 : vector<16x128xf32>
    %307 = vector.broadcast %129 : vector<1x128xf32> to vector<16x128xf32>
    %308 = arith.subf %307, %306 : vector<16x128xf32>
    %309 = math.exp %308 : vector<16x128xf32>
    %310 = arith.mulf %309, %304 : vector<16x128xf32>
    %311 = arith.addf %302, %310 : vector<16x128xf32>
    %312 = arith.addf %303, %309 : vector<16x128xf32>
    %313 = vector.broadcast %68 : vector<16x1xf32> to vector<16x128xf32>
    %314 = arith.mulf %313, %311 : vector<16x128xf32>
    %315 = vector.broadcast %68 : vector<16x1xf32> to vector<16x128xf32>
    %316 = arith.mulf %315, %312 : vector<16x128xf32>
    %c14_i32 = arith.constant 14 : i32
    %317 = tpu.dynamic_rotate %2 by %c14_i32 dim 0 : vector<16x128xf32>, i32 -> vector<16x128xf32>
    %c2_i32_72 = arith.constant 2 : i32
    %318 = tpu.dynamic_rotate %317 by %c2_i32_72 dim 1 : vector<16x128xf32>, i32 -> vector<16x128xf32>
    %319 = arith.subf %2, %318 : vector<16x128xf32>
    %320 = arith.mulf %319, %319 : vector<16x128xf32>
    %321 = vector.broadcast %92 : vector<1x128xf32> to vector<16x128xf32>
    %322 = arith.subf %321, %320 : vector<16x128xf32>
    %323 = math.exp %322 : vector<16x128xf32>
    %324 = arith.mulf %323, %318 : vector<16x128xf32>
    %c1_i32_73 = arith.constant 1 : i32
    %325 = tpu.dynamic_rotate %317 by %c1_i32_73 dim 1 : vector<16x128xf32>, i32 -> vector<16x128xf32>
    %326 = arith.subf %2, %325 : vector<16x128xf32>
    %327 = arith.mulf %326, %326 : vector<16x128xf32>
    %328 = vector.broadcast %104 : vector<1x128xf32> to vector<16x128xf32>
    %329 = arith.subf %328, %327 : vector<16x128xf32>
    %330 = math.exp %329 : vector<16x128xf32>
    %331 = arith.mulf %330, %325 : vector<16x128xf32>
    %332 = arith.addf %324, %331 : vector<16x128xf32>
    %333 = arith.addf %323, %330 : vector<16x128xf32>
    %334 = arith.subf %2, %317 : vector<16x128xf32>
    %335 = arith.mulf %334, %334 : vector<16x128xf32>
    %336 = vector.broadcast %105 : vector<1x128xf32> to vector<16x128xf32>
    %337 = arith.subf %336, %335 : vector<16x128xf32>
    %338 = math.exp %337 : vector<16x128xf32>
    %339 = arith.mulf %338, %317 : vector<16x128xf32>
    %340 = arith.addf %332, %339 : vector<16x128xf32>
    %341 = arith.addf %333, %338 : vector<16x128xf32>
    %c127_i32_74 = arith.constant 127 : i32
    %342 = tpu.dynamic_rotate %317 by %c127_i32_74 dim 1 : vector<16x128xf32>, i32 -> vector<16x128xf32>
    %343 = arith.subf %2, %342 : vector<16x128xf32>
    %344 = arith.mulf %343, %343 : vector<16x128xf32>
    %345 = vector.broadcast %117 : vector<1x128xf32> to vector<16x128xf32>
    %346 = arith.subf %345, %344 : vector<16x128xf32>
    %347 = math.exp %346 : vector<16x128xf32>
    %348 = arith.mulf %347, %342 : vector<16x128xf32>
    %349 = arith.addf %340, %348 : vector<16x128xf32>
    %350 = arith.addf %341, %347 : vector<16x128xf32>
    %c126_i32_75 = arith.constant 126 : i32
    %351 = tpu.dynamic_rotate %317 by %c126_i32_75 dim 1 : vector<16x128xf32>, i32 -> vector<16x128xf32>
    %352 = arith.subf %2, %351 : vector<16x128xf32>
    %353 = arith.mulf %352, %352 : vector<16x128xf32>
    %354 = vector.broadcast %129 : vector<1x128xf32> to vector<16x128xf32>
    %355 = arith.subf %354, %353 : vector<16x128xf32>
    %356 = math.exp %355 : vector<16x128xf32>
    %357 = arith.mulf %356, %351 : vector<16x128xf32>
    %358 = arith.addf %349, %357 : vector<16x128xf32>
    %359 = arith.addf %350, %356 : vector<16x128xf32>
    %360 = vector.broadcast %80 : vector<16x1xf32> to vector<16x128xf32>
    %361 = arith.mulf %360, %358 : vector<16x128xf32>
    %362 = vector.broadcast %80 : vector<16x1xf32> to vector<16x128xf32>
    %363 = arith.mulf %362, %359 : vector<16x128xf32>
    %364 = arith.addf %174, %221 : vector<16x128xf32>
    %365 = arith.addf %267, %314 : vector<16x128xf32>
    %366 = arith.addf %364, %365 : vector<16x128xf32>
    %367 = arith.addf %366, %361 : vector<16x128xf32>
    %368 = arith.addf %176, %223 : vector<16x128xf32>
    %369 = arith.addf %269, %316 : vector<16x128xf32>
    %370 = arith.addf %368, %369 : vector<16x128xf32>
    %371 = arith.addf %370, %363 : vector<16x128xf32>
    %372 = tpu.reciprocal %371 : vector<16x128xf32> -> vector<16x128xf32>
    %373 = arith.mulf %367, %372 : vector<16x128xf32>
    %c2_i32_76 = arith.constant 2 : i32
    %374 = tpu.dynamic_rotate %373 by %c2_i32_76 dim 0 : vector<16x128xf32>, i32 -> vector<16x128xf32>
    %c2_i32_77 = arith.constant 2 : i32
    %375 = tpu.dynamic_rotate %374 by %c2_i32_77 dim 1 : vector<16x128xf32>, i32 -> vector<16x128xf32>
    %376 = arith.subf %373, %375 : vector<16x128xf32>
    %377 = arith.mulf %376, %376 : vector<16x128xf32>
    %378 = vector.broadcast %92 : vector<1x128xf32> to vector<16x128xf32>
    %379 = arith.subf %378, %377 : vector<16x128xf32>
    %380 = math.exp %379 : vector<16x128xf32>
    %381 = arith.mulf %380, %375 : vector<16x128xf32>
    %c1_i32_78 = arith.constant 1 : i32
    %382 = tpu.dynamic_rotate %374 by %c1_i32_78 dim 1 : vector<16x128xf32>, i32 -> vector<16x128xf32>
    %383 = arith.subf %373, %382 : vector<16x128xf32>
    %384 = arith.mulf %383, %383 : vector<16x128xf32>
    %385 = vector.broadcast %104 : vector<1x128xf32> to vector<16x128xf32>
    %386 = arith.subf %385, %384 : vector<16x128xf32>
    %387 = math.exp %386 : vector<16x128xf32>
    %388 = arith.mulf %387, %382 : vector<16x128xf32>
    %389 = arith.addf %381, %388 : vector<16x128xf32>
    %390 = arith.addf %380, %387 : vector<16x128xf32>
    %391 = arith.subf %373, %374 : vector<16x128xf32>
    %392 = arith.mulf %391, %391 : vector<16x128xf32>
    %393 = vector.broadcast %105 : vector<1x128xf32> to vector<16x128xf32>
    %394 = arith.subf %393, %392 : vector<16x128xf32>
    %395 = math.exp %394 : vector<16x128xf32>
    %396 = arith.mulf %395, %374 : vector<16x128xf32>
    %397 = arith.addf %389, %396 : vector<16x128xf32>
    %398 = arith.addf %390, %395 : vector<16x128xf32>
    %c127_i32_79 = arith.constant 127 : i32
    %399 = tpu.dynamic_rotate %374 by %c127_i32_79 dim 1 : vector<16x128xf32>, i32 -> vector<16x128xf32>
    %400 = arith.subf %373, %399 : vector<16x128xf32>
    %401 = arith.mulf %400, %400 : vector<16x128xf32>
    %402 = vector.broadcast %117 : vector<1x128xf32> to vector<16x128xf32>
    %403 = arith.subf %402, %401 : vector<16x128xf32>
    %404 = math.exp %403 : vector<16x128xf32>
    %405 = arith.mulf %404, %399 : vector<16x128xf32>
    %406 = arith.addf %397, %405 : vector<16x128xf32>
    %407 = arith.addf %398, %404 : vector<16x128xf32>
    %c126_i32_80 = arith.constant 126 : i32
    %408 = tpu.dynamic_rotate %374 by %c126_i32_80 dim 1 : vector<16x128xf32>, i32 -> vector<16x128xf32>
    %409 = arith.subf %373, %408 : vector<16x128xf32>
    %410 = arith.mulf %409, %409 : vector<16x128xf32>
    %411 = vector.broadcast %129 : vector<1x128xf32> to vector<16x128xf32>
    %412 = arith.subf %411, %410 : vector<16x128xf32>
    %413 = math.exp %412 : vector<16x128xf32>
    %414 = arith.mulf %413, %408 : vector<16x128xf32>
    %415 = arith.addf %406, %414 : vector<16x128xf32>
    %416 = arith.addf %407, %413 : vector<16x128xf32>
    %417 = vector.broadcast %32 : vector<16x1xf32> to vector<16x128xf32>
    %418 = arith.mulf %417, %415 : vector<16x128xf32>
    %419 = vector.broadcast %32 : vector<16x1xf32> to vector<16x128xf32>
    %420 = arith.mulf %419, %416 : vector<16x128xf32>
    %c1_i32_81 = arith.constant 1 : i32
    %421 = tpu.dynamic_rotate %373 by %c1_i32_81 dim 0 : vector<16x128xf32>, i32 -> vector<16x128xf32>
    %c2_i32_82 = arith.constant 2 : i32
    %422 = tpu.dynamic_rotate %421 by %c2_i32_82 dim 1 : vector<16x128xf32>, i32 -> vector<16x128xf32>
    %423 = arith.subf %373, %422 : vector<16x128xf32>
    %424 = arith.mulf %423, %423 : vector<16x128xf32>
    %425 = vector.broadcast %92 : vector<1x128xf32> to vector<16x128xf32>
    %426 = arith.subf %425, %424 : vector<16x128xf32>
    %427 = math.exp %426 : vector<16x128xf32>
    %428 = arith.mulf %427, %422 : vector<16x128xf32>
    %c1_i32_83 = arith.constant 1 : i32
    %429 = tpu.dynamic_rotate %421 by %c1_i32_83 dim 1 : vector<16x128xf32>, i32 -> vector<16x128xf32>
    %430 = arith.subf %373, %429 : vector<16x128xf32>
    %431 = arith.mulf %430, %430 : vector<16x128xf32>
    %432 = vector.broadcast %104 : vector<1x128xf32> to vector<16x128xf32>
    %433 = arith.subf %432, %431 : vector<16x128xf32>
    %434 = math.exp %433 : vector<16x128xf32>
    %435 = arith.mulf %434, %429 : vector<16x128xf32>
    %436 = arith.addf %428, %435 : vector<16x128xf32>
    %437 = arith.addf %427, %434 : vector<16x128xf32>
    %438 = arith.subf %373, %421 : vector<16x128xf32>
    %439 = arith.mulf %438, %438 : vector<16x128xf32>
    %440 = vector.broadcast %105 : vector<1x128xf32> to vector<16x128xf32>
    %441 = arith.subf %440, %439 : vector<16x128xf32>
    %442 = math.exp %441 : vector<16x128xf32>
    %443 = arith.mulf %442, %421 : vector<16x128xf32>
    %444 = arith.addf %436, %443 : vector<16x128xf32>
    %445 = arith.addf %437, %442 : vector<16x128xf32>
    %c127_i32_84 = arith.constant 127 : i32
    %446 = tpu.dynamic_rotate %421 by %c127_i32_84 dim 1 : vector<16x128xf32>, i32 -> vector<16x128xf32>
    %447 = arith.subf %373, %446 : vector<16x128xf32>
    %448 = arith.mulf %447, %447 : vector<16x128xf32>
    %449 = vector.broadcast %117 : vector<1x128xf32> to vector<16x128xf32>
    %450 = arith.subf %449, %448 : vector<16x128xf32>
    %451 = math.exp %450 : vector<16x128xf32>
    %452 = arith.mulf %451, %446 : vector<16x128xf32>
    %453 = arith.addf %444, %452 : vector<16x128xf32>
    %454 = arith.addf %445, %451 : vector<16x128xf32>
    %c126_i32_85 = arith.constant 126 : i32
    %455 = tpu.dynamic_rotate %421 by %c126_i32_85 dim 1 : vector<16x128xf32>, i32 -> vector<16x128xf32>
    %456 = arith.subf %373, %455 : vector<16x128xf32>
    %457 = arith.mulf %456, %456 : vector<16x128xf32>
    %458 = vector.broadcast %129 : vector<1x128xf32> to vector<16x128xf32>
    %459 = arith.subf %458, %457 : vector<16x128xf32>
    %460 = math.exp %459 : vector<16x128xf32>
    %461 = arith.mulf %460, %455 : vector<16x128xf32>
    %462 = arith.addf %453, %461 : vector<16x128xf32>
    %463 = arith.addf %454, %460 : vector<16x128xf32>
    %464 = vector.broadcast %44 : vector<16x1xf32> to vector<16x128xf32>
    %465 = arith.mulf %464, %462 : vector<16x128xf32>
    %466 = vector.broadcast %44 : vector<16x1xf32> to vector<16x128xf32>
    %467 = arith.mulf %466, %463 : vector<16x128xf32>
    %c2_i32_86 = arith.constant 2 : i32
    %468 = tpu.dynamic_rotate %373 by %c2_i32_86 dim 1 : vector<16x128xf32>, i32 -> vector<16x128xf32>
    %469 = arith.subf %373, %468 : vector<16x128xf32>
    %470 = arith.mulf %469, %469 : vector<16x128xf32>
    %471 = vector.broadcast %92 : vector<1x128xf32> to vector<16x128xf32>
    %472 = arith.subf %471, %470 : vector<16x128xf32>
    %473 = math.exp %472 : vector<16x128xf32>
    %474 = arith.mulf %473, %468 : vector<16x128xf32>
    %c1_i32_87 = arith.constant 1 : i32
    %475 = tpu.dynamic_rotate %373 by %c1_i32_87 dim 1 : vector<16x128xf32>, i32 -> vector<16x128xf32>
    %476 = arith.subf %373, %475 : vector<16x128xf32>
    %477 = arith.mulf %476, %476 : vector<16x128xf32>
    %478 = vector.broadcast %104 : vector<1x128xf32> to vector<16x128xf32>
    %479 = arith.subf %478, %477 : vector<16x128xf32>
    %480 = math.exp %479 : vector<16x128xf32>
    %481 = arith.mulf %480, %475 : vector<16x128xf32>
    %482 = arith.addf %474, %481 : vector<16x128xf32>
    %483 = arith.addf %473, %480 : vector<16x128xf32>
    %484 = arith.subf %373, %373 : vector<16x128xf32>
    %485 = arith.mulf %484, %484 : vector<16x128xf32>
    %486 = vector.broadcast %105 : vector<1x128xf32> to vector<16x128xf32>
    %487 = arith.subf %486, %485 : vector<16x128xf32>
    %488 = math.exp %487 : vector<16x128xf32>
    %489 = arith.mulf %488, %373 : vector<16x128xf32>
    %490 = arith.addf %482, %489 : vector<16x128xf32>
    %491 = arith.addf %483, %488 : vector<16x128xf32>
    %c127_i32_88 = arith.constant 127 : i32
    %492 = tpu.dynamic_rotate %373 by %c127_i32_88 dim 1 : vector<16x128xf32>, i32 -> vector<16x128xf32>
    %493 = arith.subf %373, %492 : vector<16x128xf32>
    %494 = arith.mulf %493, %493 : vector<16x128xf32>
    %495 = vector.broadcast %117 : vector<1x128xf32> to vector<16x128xf32>
    %496 = arith.subf %495, %494 : vector<16x128xf32>
    %497 = math.exp %496 : vector<16x128xf32>
    %498 = arith.mulf %497, %492 : vector<16x128xf32>
    %499 = arith.addf %490, %498 : vector<16x128xf32>
    %500 = arith.addf %491, %497 : vector<16x128xf32>
    %c126_i32_89 = arith.constant 126 : i32
    %501 = tpu.dynamic_rotate %373 by %c126_i32_89 dim 1 : vector<16x128xf32>, i32 -> vector<16x128xf32>
    %502 = arith.subf %373, %501 : vector<16x128xf32>
    %503 = arith.mulf %502, %502 : vector<16x128xf32>
    %504 = vector.broadcast %129 : vector<1x128xf32> to vector<16x128xf32>
    %505 = arith.subf %504, %503 : vector<16x128xf32>
    %506 = math.exp %505 : vector<16x128xf32>
    %507 = arith.mulf %506, %501 : vector<16x128xf32>
    %508 = arith.addf %499, %507 : vector<16x128xf32>
    %509 = arith.addf %500, %506 : vector<16x128xf32>
    %510 = vector.broadcast %56 : vector<16x1xf32> to vector<16x128xf32>
    %511 = arith.mulf %510, %508 : vector<16x128xf32>
    %512 = vector.broadcast %56 : vector<16x1xf32> to vector<16x128xf32>
    %513 = arith.mulf %512, %509 : vector<16x128xf32>
    %c15_i32_90 = arith.constant 15 : i32
    %514 = tpu.dynamic_rotate %373 by %c15_i32_90 dim 0 : vector<16x128xf32>, i32 -> vector<16x128xf32>
    %c2_i32_91 = arith.constant 2 : i32
    %515 = tpu.dynamic_rotate %514 by %c2_i32_91 dim 1 : vector<16x128xf32>, i32 -> vector<16x128xf32>
    %516 = arith.subf %373, %515 : vector<16x128xf32>
    %517 = arith.mulf %516, %516 : vector<16x128xf32>
    %518 = vector.broadcast %92 : vector<1x128xf32> to vector<16x128xf32>
    %519 = arith.subf %518, %517 : vector<16x128xf32>
    %520 = math.exp %519 : vector<16x128xf32>
    %521 = arith.mulf %520, %515 : vector<16x128xf32>
    %c1_i32_92 = arith.constant 1 : i32
    %522 = tpu.dynamic_rotate %514 by %c1_i32_92 dim 1 : vector<16x128xf32>, i32 -> vector<16x128xf32>
    %523 = arith.subf %373, %522 : vector<16x128xf32>
    %524 = arith.mulf %523, %523 : vector<16x128xf32>
    %525 = vector.broadcast %104 : vector<1x128xf32> to vector<16x128xf32>
    %526 = arith.subf %525, %524 : vector<16x128xf32>
    %527 = math.exp %526 : vector<16x128xf32>
    %528 = arith.mulf %527, %522 : vector<16x128xf32>
    %529 = arith.addf %521, %528 : vector<16x128xf32>
    %530 = arith.addf %520, %527 : vector<16x128xf32>
    %531 = arith.subf %373, %514 : vector<16x128xf32>
    %532 = arith.mulf %531, %531 : vector<16x128xf32>
    %533 = vector.broadcast %105 : vector<1x128xf32> to vector<16x128xf32>
    %534 = arith.subf %533, %532 : vector<16x128xf32>
    %535 = math.exp %534 : vector<16x128xf32>
    %536 = arith.mulf %535, %514 : vector<16x128xf32>
    %537 = arith.addf %529, %536 : vector<16x128xf32>
    %538 = arith.addf %530, %535 : vector<16x128xf32>
    %c127_i32_93 = arith.constant 127 : i32
    %539 = tpu.dynamic_rotate %514 by %c127_i32_93 dim 1 : vector<16x128xf32>, i32 -> vector<16x128xf32>
    %540 = arith.subf %373, %539 : vector<16x128xf32>
    %541 = arith.mulf %540, %540 : vector<16x128xf32>
    %542 = vector.broadcast %117 : vector<1x128xf32> to vector<16x128xf32>
    %543 = arith.subf %542, %541 : vector<16x128xf32>
    %544 = math.exp %543 : vector<16x128xf32>
    %545 = arith.mulf %544, %539 : vector<16x128xf32>
    %546 = arith.addf %537, %545 : vector<16x128xf32>
    %547 = arith.addf %538, %544 : vector<16x128xf32>
    %c126_i32_94 = arith.constant 126 : i32
    %548 = tpu.dynamic_rotate %514 by %c126_i32_94 dim 1 : vector<16x128xf32>, i32 -> vector<16x128xf32>
    %549 = arith.subf %373, %548 : vector<16x128xf32>
    %550 = arith.mulf %549, %549 : vector<16x128xf32>
    %551 = vector.broadcast %129 : vector<1x128xf32> to vector<16x128xf32>
    %552 = arith.subf %551, %550 : vector<16x128xf32>
    %553 = math.exp %552 : vector<16x128xf32>
    %554 = arith.mulf %553, %548 : vector<16x128xf32>
    %555 = arith.addf %546, %554 : vector<16x128xf32>
    %556 = arith.addf %547, %553 : vector<16x128xf32>
    %557 = vector.broadcast %68 : vector<16x1xf32> to vector<16x128xf32>
    %558 = arith.mulf %557, %555 : vector<16x128xf32>
    %559 = vector.broadcast %68 : vector<16x1xf32> to vector<16x128xf32>
    %560 = arith.mulf %559, %556 : vector<16x128xf32>
    %c14_i32_95 = arith.constant 14 : i32
    %561 = tpu.dynamic_rotate %373 by %c14_i32_95 dim 0 : vector<16x128xf32>, i32 -> vector<16x128xf32>
    %c2_i32_96 = arith.constant 2 : i32
    %562 = tpu.dynamic_rotate %561 by %c2_i32_96 dim 1 : vector<16x128xf32>, i32 -> vector<16x128xf32>
    %563 = arith.subf %373, %562 : vector<16x128xf32>
    %564 = arith.mulf %563, %563 : vector<16x128xf32>
    %565 = vector.broadcast %92 : vector<1x128xf32> to vector<16x128xf32>
    %566 = arith.subf %565, %564 : vector<16x128xf32>
    %567 = math.exp %566 : vector<16x128xf32>
    %568 = arith.mulf %567, %562 : vector<16x128xf32>
    %c1_i32_97 = arith.constant 1 : i32
    %569 = tpu.dynamic_rotate %561 by %c1_i32_97 dim 1 : vector<16x128xf32>, i32 -> vector<16x128xf32>
    %570 = arith.subf %373, %569 : vector<16x128xf32>
    %571 = arith.mulf %570, %570 : vector<16x128xf32>
    %572 = vector.broadcast %104 : vector<1x128xf32> to vector<16x128xf32>
    %573 = arith.subf %572, %571 : vector<16x128xf32>
    %574 = math.exp %573 : vector<16x128xf32>
    %575 = arith.mulf %574, %569 : vector<16x128xf32>
    %576 = arith.addf %568, %575 : vector<16x128xf32>
    %577 = arith.addf %567, %574 : vector<16x128xf32>
    %578 = arith.subf %373, %561 : vector<16x128xf32>
    %579 = arith.mulf %578, %578 : vector<16x128xf32>
    %580 = vector.broadcast %105 : vector<1x128xf32> to vector<16x128xf32>
    %581 = arith.subf %580, %579 : vector<16x128xf32>
    %582 = math.exp %581 : vector<16x128xf32>
    %583 = arith.mulf %582, %561 : vector<16x128xf32>
    %584 = arith.addf %576, %583 : vector<16x128xf32>
    %585 = arith.addf %577, %582 : vector<16x128xf32>
    %c127_i32_98 = arith.constant 127 : i32
    %586 = tpu.dynamic_rotate %561 by %c127_i32_98 dim 1 : vector<16x128xf32>, i32 -> vector<16x128xf32>
    %587 = arith.subf %373, %586 : vector<16x128xf32>
    %588 = arith.mulf %587, %587 : vector<16x128xf32>
    %589 = vector.broadcast %117 : vector<1x128xf32> to vector<16x128xf32>
    %590 = arith.subf %589, %588 : vector<16x128xf32>
    %591 = math.exp %590 : vector<16x128xf32>
    %592 = arith.mulf %591, %586 : vector<16x128xf32>
    %593 = arith.addf %584, %592 : vector<16x128xf32>
    %594 = arith.addf %585, %591 : vector<16x128xf32>
    %c126_i32_99 = arith.constant 126 : i32
    %595 = tpu.dynamic_rotate %561 by %c126_i32_99 dim 1 : vector<16x128xf32>, i32 -> vector<16x128xf32>
    %596 = arith.subf %373, %595 : vector<16x128xf32>
    %597 = arith.mulf %596, %596 : vector<16x128xf32>
    %598 = vector.broadcast %129 : vector<1x128xf32> to vector<16x128xf32>
    %599 = arith.subf %598, %597 : vector<16x128xf32>
    %600 = math.exp %599 : vector<16x128xf32>
    %601 = arith.mulf %600, %595 : vector<16x128xf32>
    %602 = arith.addf %593, %601 : vector<16x128xf32>
    %603 = arith.addf %594, %600 : vector<16x128xf32>
    %604 = vector.broadcast %80 : vector<16x1xf32> to vector<16x128xf32>
    %605 = arith.mulf %604, %602 : vector<16x128xf32>
    %606 = vector.broadcast %80 : vector<16x1xf32> to vector<16x128xf32>
    %607 = arith.mulf %606, %603 : vector<16x128xf32>
    %608 = arith.addf %418, %465 : vector<16x128xf32>
    %609 = arith.addf %511, %558 : vector<16x128xf32>
    %610 = arith.addf %608, %609 : vector<16x128xf32>
    %611 = arith.addf %610, %605 : vector<16x128xf32>
    %612 = arith.addf %420, %467 : vector<16x128xf32>
    %613 = arith.addf %513, %560 : vector<16x128xf32>
    %614 = arith.addf %612, %613 : vector<16x128xf32>
    %615 = arith.addf %614, %607 : vector<16x128xf32>
    %616 = tpu.reciprocal %615 : vector<16x128xf32> -> vector<16x128xf32>
    %617 = arith.mulf %611, %616 : vector<16x128xf32>
    %c2_i32_100 = arith.constant 2 : i32
    %618 = tpu.dynamic_rotate %617 by %c2_i32_100 dim 0 : vector<16x128xf32>, i32 -> vector<16x128xf32>
    %c2_i32_101 = arith.constant 2 : i32
    %619 = tpu.dynamic_rotate %618 by %c2_i32_101 dim 1 : vector<16x128xf32>, i32 -> vector<16x128xf32>
    %620 = arith.subf %617, %619 : vector<16x128xf32>
    %621 = arith.mulf %620, %620 : vector<16x128xf32>
    %622 = vector.broadcast %92 : vector<1x128xf32> to vector<16x128xf32>
    %623 = arith.subf %622, %621 : vector<16x128xf32>
    %624 = math.exp %623 : vector<16x128xf32>
    %625 = arith.mulf %624, %619 : vector<16x128xf32>
    %c1_i32_102 = arith.constant 1 : i32
    %626 = tpu.dynamic_rotate %618 by %c1_i32_102 dim 1 : vector<16x128xf32>, i32 -> vector<16x128xf32>
    %627 = arith.subf %617, %626 : vector<16x128xf32>
    %628 = arith.mulf %627, %627 : vector<16x128xf32>
    %629 = vector.broadcast %104 : vector<1x128xf32> to vector<16x128xf32>
    %630 = arith.subf %629, %628 : vector<16x128xf32>
    %631 = math.exp %630 : vector<16x128xf32>
    %632 = arith.mulf %631, %626 : vector<16x128xf32>
    %633 = arith.addf %625, %632 : vector<16x128xf32>
    %634 = arith.addf %624, %631 : vector<16x128xf32>
    %635 = arith.subf %617, %618 : vector<16x128xf32>
    %636 = arith.mulf %635, %635 : vector<16x128xf32>
    %637 = vector.broadcast %105 : vector<1x128xf32> to vector<16x128xf32>
    %638 = arith.subf %637, %636 : vector<16x128xf32>
    %639 = math.exp %638 : vector<16x128xf32>
    %640 = arith.mulf %639, %618 : vector<16x128xf32>
    %641 = arith.addf %633, %640 : vector<16x128xf32>
    %642 = arith.addf %634, %639 : vector<16x128xf32>
    %c127_i32_103 = arith.constant 127 : i32
    %643 = tpu.dynamic_rotate %618 by %c127_i32_103 dim 1 : vector<16x128xf32>, i32 -> vector<16x128xf32>
    %644 = arith.subf %617, %643 : vector<16x128xf32>
    %645 = arith.mulf %644, %644 : vector<16x128xf32>
    %646 = vector.broadcast %117 : vector<1x128xf32> to vector<16x128xf32>
    %647 = arith.subf %646, %645 : vector<16x128xf32>
    %648 = math.exp %647 : vector<16x128xf32>
    %649 = arith.mulf %648, %643 : vector<16x128xf32>
    %650 = arith.addf %641, %649 : vector<16x128xf32>
    %651 = arith.addf %642, %648 : vector<16x128xf32>
    %c126_i32_104 = arith.constant 126 : i32
    %652 = tpu.dynamic_rotate %618 by %c126_i32_104 dim 1 : vector<16x128xf32>, i32 -> vector<16x128xf32>
    %653 = arith.subf %617, %652 : vector<16x128xf32>
    %654 = arith.mulf %653, %653 : vector<16x128xf32>
    %655 = vector.broadcast %129 : vector<1x128xf32> to vector<16x128xf32>
    %656 = arith.subf %655, %654 : vector<16x128xf32>
    %657 = math.exp %656 : vector<16x128xf32>
    %658 = arith.mulf %657, %652 : vector<16x128xf32>
    %659 = arith.addf %650, %658 : vector<16x128xf32>
    %660 = arith.addf %651, %657 : vector<16x128xf32>
    %661 = vector.broadcast %32 : vector<16x1xf32> to vector<16x128xf32>
    %662 = arith.mulf %661, %659 : vector<16x128xf32>
    %663 = vector.broadcast %32 : vector<16x1xf32> to vector<16x128xf32>
    %664 = arith.mulf %663, %660 : vector<16x128xf32>
    %c1_i32_105 = arith.constant 1 : i32
    %665 = tpu.dynamic_rotate %617 by %c1_i32_105 dim 0 : vector<16x128xf32>, i32 -> vector<16x128xf32>
    %c2_i32_106 = arith.constant 2 : i32
    %666 = tpu.dynamic_rotate %665 by %c2_i32_106 dim 1 : vector<16x128xf32>, i32 -> vector<16x128xf32>
    %667 = arith.subf %617, %666 : vector<16x128xf32>
    %668 = arith.mulf %667, %667 : vector<16x128xf32>
    %669 = vector.broadcast %92 : vector<1x128xf32> to vector<16x128xf32>
    %670 = arith.subf %669, %668 : vector<16x128xf32>
    %671 = math.exp %670 : vector<16x128xf32>
    %672 = arith.mulf %671, %666 : vector<16x128xf32>
    %c1_i32_107 = arith.constant 1 : i32
    %673 = tpu.dynamic_rotate %665 by %c1_i32_107 dim 1 : vector<16x128xf32>, i32 -> vector<16x128xf32>
    %674 = arith.subf %617, %673 : vector<16x128xf32>
    %675 = arith.mulf %674, %674 : vector<16x128xf32>
    %676 = vector.broadcast %104 : vector<1x128xf32> to vector<16x128xf32>
    %677 = arith.subf %676, %675 : vector<16x128xf32>
    %678 = math.exp %677 : vector<16x128xf32>
    %679 = arith.mulf %678, %673 : vector<16x128xf32>
    %680 = arith.addf %672, %679 : vector<16x128xf32>
    %681 = arith.addf %671, %678 : vector<16x128xf32>
    %682 = arith.subf %617, %665 : vector<16x128xf32>
    %683 = arith.mulf %682, %682 : vector<16x128xf32>
    %684 = vector.broadcast %105 : vector<1x128xf32> to vector<16x128xf32>
    %685 = arith.subf %684, %683 : vector<16x128xf32>
    %686 = math.exp %685 : vector<16x128xf32>
    %687 = arith.mulf %686, %665 : vector<16x128xf32>
    %688 = arith.addf %680, %687 : vector<16x128xf32>
    %689 = arith.addf %681, %686 : vector<16x128xf32>
    %c127_i32_108 = arith.constant 127 : i32
    %690 = tpu.dynamic_rotate %665 by %c127_i32_108 dim 1 : vector<16x128xf32>, i32 -> vector<16x128xf32>
    %691 = arith.subf %617, %690 : vector<16x128xf32>
    %692 = arith.mulf %691, %691 : vector<16x128xf32>
    %693 = vector.broadcast %117 : vector<1x128xf32> to vector<16x128xf32>
    %694 = arith.subf %693, %692 : vector<16x128xf32>
    %695 = math.exp %694 : vector<16x128xf32>
    %696 = arith.mulf %695, %690 : vector<16x128xf32>
    %697 = arith.addf %688, %696 : vector<16x128xf32>
    %698 = arith.addf %689, %695 : vector<16x128xf32>
    %c126_i32_109 = arith.constant 126 : i32
    %699 = tpu.dynamic_rotate %665 by %c126_i32_109 dim 1 : vector<16x128xf32>, i32 -> vector<16x128xf32>
    %700 = arith.subf %617, %699 : vector<16x128xf32>
    %701 = arith.mulf %700, %700 : vector<16x128xf32>
    %702 = vector.broadcast %129 : vector<1x128xf32> to vector<16x128xf32>
    %703 = arith.subf %702, %701 : vector<16x128xf32>
    %704 = math.exp %703 : vector<16x128xf32>
    %705 = arith.mulf %704, %699 : vector<16x128xf32>
    %706 = arith.addf %697, %705 : vector<16x128xf32>
    %707 = arith.addf %698, %704 : vector<16x128xf32>
    %708 = vector.broadcast %44 : vector<16x1xf32> to vector<16x128xf32>
    %709 = arith.mulf %708, %706 : vector<16x128xf32>
    %710 = vector.broadcast %44 : vector<16x1xf32> to vector<16x128xf32>
    %711 = arith.mulf %710, %707 : vector<16x128xf32>
    %c2_i32_110 = arith.constant 2 : i32
    %712 = tpu.dynamic_rotate %617 by %c2_i32_110 dim 1 : vector<16x128xf32>, i32 -> vector<16x128xf32>
    %713 = arith.subf %617, %712 : vector<16x128xf32>
    %714 = arith.mulf %713, %713 : vector<16x128xf32>
    %715 = vector.broadcast %92 : vector<1x128xf32> to vector<16x128xf32>
    %716 = arith.subf %715, %714 : vector<16x128xf32>
    %717 = math.exp %716 : vector<16x128xf32>
    %718 = arith.mulf %717, %712 : vector<16x128xf32>
    %c1_i32_111 = arith.constant 1 : i32
    %719 = tpu.dynamic_rotate %617 by %c1_i32_111 dim 1 : vector<16x128xf32>, i32 -> vector<16x128xf32>
    %720 = arith.subf %617, %719 : vector<16x128xf32>
    %721 = arith.mulf %720, %720 : vector<16x128xf32>
    %722 = vector.broadcast %104 : vector<1x128xf32> to vector<16x128xf32>
    %723 = arith.subf %722, %721 : vector<16x128xf32>
    %724 = math.exp %723 : vector<16x128xf32>
    %725 = arith.mulf %724, %719 : vector<16x128xf32>
    %726 = arith.addf %718, %725 : vector<16x128xf32>
    %727 = arith.addf %717, %724 : vector<16x128xf32>
    %728 = arith.subf %617, %617 : vector<16x128xf32>
    %729 = arith.mulf %728, %728 : vector<16x128xf32>
    %730 = vector.broadcast %105 : vector<1x128xf32> to vector<16x128xf32>
    %731 = arith.subf %730, %729 : vector<16x128xf32>
    %732 = math.exp %731 : vector<16x128xf32>
    %733 = arith.mulf %732, %617 : vector<16x128xf32>
    %734 = arith.addf %726, %733 : vector<16x128xf32>
    %735 = arith.addf %727, %732 : vector<16x128xf32>
    %c127_i32_112 = arith.constant 127 : i32
    %736 = tpu.dynamic_rotate %617 by %c127_i32_112 dim 1 : vector<16x128xf32>, i32 -> vector<16x128xf32>
    %737 = arith.subf %617, %736 : vector<16x128xf32>
    %738 = arith.mulf %737, %737 : vector<16x128xf32>
    %739 = vector.broadcast %117 : vector<1x128xf32> to vector<16x128xf32>
    %740 = arith.subf %739, %738 : vector<16x128xf32>
    %741 = math.exp %740 : vector<16x128xf32>
    %742 = arith.mulf %741, %736 : vector<16x128xf32>
    %743 = arith.addf %734, %742 : vector<16x128xf32>
    %744 = arith.addf %735, %741 : vector<16x128xf32>
    %c126_i32_113 = arith.constant 126 : i32
    %745 = tpu.dynamic_rotate %617 by %c126_i32_113 dim 1 : vector<16x128xf32>, i32 -> vector<16x128xf32>
    %746 = arith.subf %617, %745 : vector<16x128xf32>
    %747 = arith.mulf %746, %746 : vector<16x128xf32>
    %748 = vector.broadcast %129 : vector<1x128xf32> to vector<16x128xf32>
    %749 = arith.subf %748, %747 : vector<16x128xf32>
    %750 = math.exp %749 : vector<16x128xf32>
    %751 = arith.mulf %750, %745 : vector<16x128xf32>
    %752 = arith.addf %743, %751 : vector<16x128xf32>
    %753 = arith.addf %744, %750 : vector<16x128xf32>
    %754 = vector.broadcast %56 : vector<16x1xf32> to vector<16x128xf32>
    %755 = arith.mulf %754, %752 : vector<16x128xf32>
    %756 = vector.broadcast %56 : vector<16x1xf32> to vector<16x128xf32>
    %757 = arith.mulf %756, %753 : vector<16x128xf32>
    %c15_i32_114 = arith.constant 15 : i32
    %758 = tpu.dynamic_rotate %617 by %c15_i32_114 dim 0 : vector<16x128xf32>, i32 -> vector<16x128xf32>
    %c2_i32_115 = arith.constant 2 : i32
    %759 = tpu.dynamic_rotate %758 by %c2_i32_115 dim 1 : vector<16x128xf32>, i32 -> vector<16x128xf32>
    %760 = arith.subf %617, %759 : vector<16x128xf32>
    %761 = arith.mulf %760, %760 : vector<16x128xf32>
    %762 = vector.broadcast %92 : vector<1x128xf32> to vector<16x128xf32>
    %763 = arith.subf %762, %761 : vector<16x128xf32>
    %764 = math.exp %763 : vector<16x128xf32>
    %765 = arith.mulf %764, %759 : vector<16x128xf32>
    %c1_i32_116 = arith.constant 1 : i32
    %766 = tpu.dynamic_rotate %758 by %c1_i32_116 dim 1 : vector<16x128xf32>, i32 -> vector<16x128xf32>
    %767 = arith.subf %617, %766 : vector<16x128xf32>
    %768 = arith.mulf %767, %767 : vector<16x128xf32>
    %769 = vector.broadcast %104 : vector<1x128xf32> to vector<16x128xf32>
    %770 = arith.subf %769, %768 : vector<16x128xf32>
    %771 = math.exp %770 : vector<16x128xf32>
    %772 = arith.mulf %771, %766 : vector<16x128xf32>
    %773 = arith.addf %765, %772 : vector<16x128xf32>
    %774 = arith.addf %764, %771 : vector<16x128xf32>
    %775 = arith.subf %617, %758 : vector<16x128xf32>
    %776 = arith.mulf %775, %775 : vector<16x128xf32>
    %777 = vector.broadcast %105 : vector<1x128xf32> to vector<16x128xf32>
    %778 = arith.subf %777, %776 : vector<16x128xf32>
    %779 = math.exp %778 : vector<16x128xf32>
    %780 = arith.mulf %779, %758 : vector<16x128xf32>
    %781 = arith.addf %773, %780 : vector<16x128xf32>
    %782 = arith.addf %774, %779 : vector<16x128xf32>
    %c127_i32_117 = arith.constant 127 : i32
    %783 = tpu.dynamic_rotate %758 by %c127_i32_117 dim 1 : vector<16x128xf32>, i32 -> vector<16x128xf32>
    %784 = arith.subf %617, %783 : vector<16x128xf32>
    %785 = arith.mulf %784, %784 : vector<16x128xf32>
    %786 = vector.broadcast %117 : vector<1x128xf32> to vector<16x128xf32>
    %787 = arith.subf %786, %785 : vector<16x128xf32>
    %788 = math.exp %787 : vector<16x128xf32>
    %789 = arith.mulf %788, %783 : vector<16x128xf32>
    %790 = arith.addf %781, %789 : vector<16x128xf32>
    %791 = arith.addf %782, %788 : vector<16x128xf32>
    %c126_i32_118 = arith.constant 126 : i32
    %792 = tpu.dynamic_rotate %758 by %c126_i32_118 dim 1 : vector<16x128xf32>, i32 -> vector<16x128xf32>
    %793 = arith.subf %617, %792 : vector<16x128xf32>
    %794 = arith.mulf %793, %793 : vector<16x128xf32>
    %795 = vector.broadcast %129 : vector<1x128xf32> to vector<16x128xf32>
    %796 = arith.subf %795, %794 : vector<16x128xf32>
    %797 = math.exp %796 : vector<16x128xf32>
    %798 = arith.mulf %797, %792 : vector<16x128xf32>
    %799 = arith.addf %790, %798 : vector<16x128xf32>
    %800 = arith.addf %791, %797 : vector<16x128xf32>
    %801 = vector.broadcast %68 : vector<16x1xf32> to vector<16x128xf32>
    %802 = arith.mulf %801, %799 : vector<16x128xf32>
    %803 = vector.broadcast %68 : vector<16x1xf32> to vector<16x128xf32>
    %804 = arith.mulf %803, %800 : vector<16x128xf32>
    %c14_i32_119 = arith.constant 14 : i32
    %805 = tpu.dynamic_rotate %617 by %c14_i32_119 dim 0 : vector<16x128xf32>, i32 -> vector<16x128xf32>
    %c2_i32_120 = arith.constant 2 : i32
    %806 = tpu.dynamic_rotate %805 by %c2_i32_120 dim 1 : vector<16x128xf32>, i32 -> vector<16x128xf32>
    %807 = arith.subf %617, %806 : vector<16x128xf32>
    %808 = arith.mulf %807, %807 : vector<16x128xf32>
    %809 = vector.broadcast %92 : vector<1x128xf32> to vector<16x128xf32>
    %810 = arith.subf %809, %808 : vector<16x128xf32>
    %811 = math.exp %810 : vector<16x128xf32>
    %812 = arith.mulf %811, %806 : vector<16x128xf32>
    %c1_i32_121 = arith.constant 1 : i32
    %813 = tpu.dynamic_rotate %805 by %c1_i32_121 dim 1 : vector<16x128xf32>, i32 -> vector<16x128xf32>
    %814 = arith.subf %617, %813 : vector<16x128xf32>
    %815 = arith.mulf %814, %814 : vector<16x128xf32>
    %816 = vector.broadcast %104 : vector<1x128xf32> to vector<16x128xf32>
    %817 = arith.subf %816, %815 : vector<16x128xf32>
    %818 = math.exp %817 : vector<16x128xf32>
    %819 = arith.mulf %818, %813 : vector<16x128xf32>
    %820 = arith.addf %812, %819 : vector<16x128xf32>
    %821 = arith.addf %811, %818 : vector<16x128xf32>
    %822 = arith.subf %617, %805 : vector<16x128xf32>
    %823 = arith.mulf %822, %822 : vector<16x128xf32>
    %824 = vector.broadcast %105 : vector<1x128xf32> to vector<16x128xf32>
    %825 = arith.subf %824, %823 : vector<16x128xf32>
    %826 = math.exp %825 : vector<16x128xf32>
    %827 = arith.mulf %826, %805 : vector<16x128xf32>
    %828 = arith.addf %820, %827 : vector<16x128xf32>
    %829 = arith.addf %821, %826 : vector<16x128xf32>
    %c127_i32_122 = arith.constant 127 : i32
    %830 = tpu.dynamic_rotate %805 by %c127_i32_122 dim 1 : vector<16x128xf32>, i32 -> vector<16x128xf32>
    %831 = arith.subf %617, %830 : vector<16x128xf32>
    %832 = arith.mulf %831, %831 : vector<16x128xf32>
    %833 = vector.broadcast %117 : vector<1x128xf32> to vector<16x128xf32>
    %834 = arith.subf %833, %832 : vector<16x128xf32>
    %835 = math.exp %834 : vector<16x128xf32>
    %836 = arith.mulf %835, %830 : vector<16x128xf32>
    %837 = arith.addf %828, %836 : vector<16x128xf32>
    %838 = arith.addf %829, %835 : vector<16x128xf32>
    %c126_i32_123 = arith.constant 126 : i32
    %839 = tpu.dynamic_rotate %805 by %c126_i32_123 dim 1 : vector<16x128xf32>, i32 -> vector<16x128xf32>
    %840 = arith.subf %617, %839 : vector<16x128xf32>
    %841 = arith.mulf %840, %840 : vector<16x128xf32>
    %842 = vector.broadcast %129 : vector<1x128xf32> to vector<16x128xf32>
    %843 = arith.subf %842, %841 : vector<16x128xf32>
    %844 = math.exp %843 : vector<16x128xf32>
    %845 = arith.mulf %844, %839 : vector<16x128xf32>
    %846 = arith.addf %837, %845 : vector<16x128xf32>
    %847 = arith.addf %838, %844 : vector<16x128xf32>
    %848 = vector.broadcast %80 : vector<16x1xf32> to vector<16x128xf32>
    %849 = arith.mulf %848, %846 : vector<16x128xf32>
    %850 = vector.broadcast %80 : vector<16x1xf32> to vector<16x128xf32>
    %851 = arith.mulf %850, %847 : vector<16x128xf32>
    %852 = arith.addf %662, %709 : vector<16x128xf32>
    %853 = arith.addf %755, %802 : vector<16x128xf32>
    %854 = arith.addf %852, %853 : vector<16x128xf32>
    %855 = arith.addf %854, %849 : vector<16x128xf32>
    %856 = arith.addf %664, %711 : vector<16x128xf32>
    %857 = arith.addf %757, %804 : vector<16x128xf32>
    %858 = arith.addf %856, %857 : vector<16x128xf32>
    %859 = arith.addf %858, %851 : vector<16x128xf32>
    %860 = tpu.reciprocal %859 : vector<16x128xf32> -> vector<16x128xf32>
    %861 = arith.mulf %855, %860 : vector<16x128xf32>
    %cst_124 = arith.constant 0.0141421352 : f32
    %862 = vector.broadcast %cst_124 : f32 to vector<16x128xf32>
    %863 = arith.mulf %861, %862 : vector<16x128xf32>
    %c0_125 = arith.constant 0 : index
    %c0_126 = arith.constant 0 : index
    %864 = vector.load %arg2[%c0_125, %c0_126] : memref<16x128xf32, #tpu.memory_space<vmem>>, vector<16x128xf32>
    tpu.vector_store %arg2[%c0_125, %c0_126], %863 {strides = array<i32>} : memref<16x128xf32, #tpu.memory_space<vmem>>, vector<16x128xf32>,
    return
  }
  func.func @transform_0(%arg0: i32) -> (i32, i32) {
    %c0_i32 = arith.constant 0 : i32
    %c0_i32_0 = arith.constant 0 : i32
    return %c0_i32, %arg0 : i32, i32
  }
  func.func @transform_1(%arg0: i32) -> (i32, i32) {
    %c0_i32 = arith.constant 0 : i32
    %c0_i32_0 = arith.constant 0 : i32
    return %c0_i32, %arg0 : i32, i32
  }
}

</mosaic_0001>

<llo_original>
// kernel: tpu_custom_call.1
$region0: #{tpu_custom_call.1}
  #allocation0 [shape = 'u32[]', space=smem, size = 0x4, offset = 0x4, fixed_abs, tag = 'smem constant byte address 0x4 - core index']
  #allocation1 [shape = 'u32[144,128]{1,0:T(1,128)}', space=vmem, size = 0x12000, scoped, tag = 'internal scratch']
  %s0 = inlined_call_operand.hbm [shape: f32[16,256], index: 0, kind: input, shape index: {}]
  %s1 = inlined_call_operand.hbm [shape: f32[16,256], index: 1, kind: output, shape index: {}]
  %s2 = sld [smem:[#allocation0]]
  $region41: #{tpu_custom_call.1} parent=0
    _
  %s4 = ssub.s32 1, %s2
  %s5 = scalar_select 0, %s4, %s2
  $region1: #{tpu_custom_call.1} parent=0
    #allocation2 [shape = 'u8[16384]{0}', space=vmem, size = 0x4000, scoped, tag = 'input window, operand 0']
    #allocation3 [shape = 's32[2]{0}', space=sflag, size = 0x8, scoped, tag = 'scoped memory for tpu_custom_call.1']
    #allocation4 [shape = 's32[2]{0}', space=sflag, size = 0x8, scoped, tag = 'scoped memory for tpu_custom_call.1']
    #allocation5 [shape = 'u8[16384]{0}', space=vmem, size = 0x4000, scoped, tag = 'output window, operand 0']
    %6 = vsyncpa [#allocation3], 0
    %s7 = scalar_lea.sflag [#allocation3], 1
    %8 = vsyncpa %s7, 0
    %9 = vsyncpa [#allocation4], 0
    %s10 = scalar_lea.sflag [#allocation4], 1
    %11 = vsyncpa %s10, 0
    loop: start=0, step=1, limit=4
    $region2: #{tpu_custom_call.1} parent=1 // loop_pre_header
      _
    $region3: #{tpu_custom_call.1} parent=1 // loop_header
      %s13 = sphi 0, %s17
      %p14 = scmp.ge.s32.totalorder %s13, 4
      %s23 = sphi 0, %s25
      %s26 = sphi 0, %s23
      %s27 = sphi 0, %s26
      %s43 = sphi 0, %s27
      %s49 = sphi 0, %s51
      %s52 = sphi 0, %s49
      %s53 = sphi 0, %s52
      %s69 = sphi 0, %s53
    $region4: #{tpu_custom_call.1} parent=1 // loop_header_branch
      %16 = sbr.rel (%p14) target = $region8
    $region5: #{tpu_custom_call.1} parent=1 // loop_body
      %s18 = ssub.s32 %s13, 1
      %s19 = ssub.s32 %s13, 2
      %s20 = sadd.s32 %s13, 1
      %s21 = ssub.s32 %s13, %s20
      %p22 = scmp.eq.s32.totalorder %s21, 0
      %s24 = sadd.s32 %s23, 1
      %s25 = scalar_select %p22, %s23, %s24
      %p28 = pneg %p22
      %p29 = scmp.eq.s32.totalorder %s13, 1
      %p30 = por %p28, %p29
      %p31 = scmp.ne.s32.totalorder %s23, %s26
      %p32 = scmp.eq.s32.totalorder %s13, 0
      %p33 = por %p31, %p32
      %p34 = scmp.ne.s32.totalorder %s23, %s26
      %p35 = scmp.eq.s32.totalorder %s18, 1
      %p36 = por %p34, %p35
      %p37 = scmp.ne.s32.totalorder %s26, %s27
      %p38 = scmp.eq.s32.totalorder %s18, 0
      %p39 = por %p37, %p38
      %p40 = scmp.ne.s32.totalorder %s26, %s27
      %p41 = scmp.eq.s32.totalorder %s19, 1
      %p42 = por %p40, %p41
      %p44 = scmp.ne.s32.totalorder %s27, %s43
      %p45 = scmp.eq.s32.totalorder %s19, 0
      %p46 = por %p44, %p45
      %s47 = ssub.s32 %s13, %s20
      %p48 = scmp.eq.s32.totalorder %s47, 0
      %s50 = sadd.s32 %s49, 1
      %s51 = scalar_select %p48, %s49, %s50
      %p54 = pneg %p48
      %p55 = scmp.eq.s32.totalorder %s13, 1
      %p56 = por %p54, %p55
      %p57 = scmp.ne.s32.totalorder %s49, %s52
      %p58 = scmp.eq.s32.totalorder %s13, 0
      %p59 = por %p57, %p58
      %p60 = scmp.ne.s32.totalorder %s49, %s52
      %p61 = scmp.eq.s32.totalorder %s18, 1
      %p62 = por %p60, %p61
      %p63 = scmp.ne.s32.totalorder %s52, %s53
      %p64 = scmp.eq.s32.totalorder %s18, 0
      %p65 = por %p63, %p64
      %p66 = scmp.ne.s32.totalorder %s52, %s53
      %p67 = scmp.eq.s32.totalorder %s19, 1
      %p68 = por %p66, %p67
      %p70 = scmp.ne.s32.totalorder %s53, %s69
      %p71 = scmp.eq.s32.totalorder %s19, 0
      %p72 = por %p70, %p71
      %p73 = scmp.le.s32.totalorder 1, %s13
      %p74 = scmp.lt.s32.totalorder %s13, 3
      %p75 = pnand %p73, %p74
      %p76 = pneg %p75
      // Predicated region
      $region9: #{tpu_custom_call.1} parent=5 // pred_check
        _
      $region10: #{tpu_custom_call.1} parent=5 // pred_check_branch
        %78 = sbr.rel (%p75) target = $region12
      $region11: #{tpu_custom_call.1} parent=5 // pred_region
        %s79 = ssub.s32 %s13, 1
      $region12: #{tpu_custom_call.1} parent=5 // pred_fallthru
        _
      %p80 = scmp.lt.s32.totalorder %s13, 2
      // Predicated region
      $region13: #{tpu_custom_call.1} parent=5 // pred_check
        %p81 = pneg %p80
      $region14: #{tpu_custom_call.1} parent=5 // pred_check_branch
        %83 = sbr.rel (%p81) target = $region16
      $region15: #{tpu_custom_call.1} parent=5 // pred_region
        // Predicated region
        $region17: #{tpu_custom_call.1} parent=15 // pred_check
          %p84 = pneg %p33
        $region18: #{tpu_custom_call.1} parent=15 // pred_check_branch
          %86 = sbr.rel (%p84) target = $region20
        $region19: #{tpu_custom_call.1} parent=15 // pred_region
          %s87 = sand.u32 %s23, 1
          %s88 = scalar_lea.sflag [#allocation3], %s87
          %s89 = sand.u32 %s23, 1
          %s90 = smul.addr %s89, 16
          %s91 = scalar_lea.vmem [#allocation2], %s90
          %s93 = ssub.s32 256, 256
          %94 = vsyncadd %s88, %s93
          %s95 = smul.addr %s13, 128
          %s96 = scalar_lea.hbm %s0, %s95
          %s97 = sshll.u32 %s91, 4
          %s98 = int_to_ptr.vmem [resolvable:$true] %s97
          %103 = dma.hbm_to_vmem [thread:$0]  %s96, 256, %s98, %s88, 256, 128, 8
        $region20: #{tpu_custom_call.1} parent=15 // pred_fallthru
          _
      $region16: #{tpu_custom_call.1} parent=5 // pred_fallthru
        _
      %p104 = scmp.le.s32.totalorder 1, %s13
      %p105 = scmp.lt.s32.totalorder %s13, 3
      %p106 = pnand %p104, %p105
      %p107 = pneg %p106
      // Predicated region
      $region21: #{tpu_custom_call.1} parent=5 // pred_check
        _
      $region22: #{tpu_custom_call.1} parent=5 // pred_check_branch
        %109 = sbr.rel (%p106) target = $region24
      $region23: #{tpu_custom_call.1} parent=5 // pred_region
        %s110 = ssub.s32 %s13, 1
        %s111 = sand.u32 %s26, 1
        %s112 = scalar_lea.sflag [#allocation3], %s111
        %s113 = sand.u32 %s26, 1
        %s114 = smul.addr %s113, 16
        %s115 = scalar_lea.vmem [#allocation2], %s114
        // Predicated region
        $region25: #{tpu_custom_call.1} parent=23 // pred_check
          %p116 = pneg %p39
        $region26: #{tpu_custom_call.1} parent=23 // pred_check_branch
          %118 = sbr.rel (%p116) target = $region28
        $region27: #{tpu_custom_call.1} parent=23 // pred_region
          %119 = dma.done %s112, 256
        $region28: #{tpu_custom_call.1} parent=23 // pred_fallthru
          _
        %s120 = sand.u32 %s26, 1
        %s121 = scalar_lea.sflag [#allocation3], %s120
        %s122 = sand.u32 %s26, 1
        %s123 = smul.addr %s122, 16
        %s124 = scalar_lea.vmem [#allocation2], %s123
        %p125 = pneg %p39
        %p126 = pneg %p36
        %p127 = pneg %p65
        %p128 = pneg %p62
        %s129 = sand.u32 %s52, 1
        %s130 = scalar_lea.sflag [#allocation4], %s129
        %s131 = sand.u32 %s52, 1
        %s132 = smul.addr %s131, 16
        %s133 = scalar_lea.vmem [#allocation5], %s132
        %v134 = vld [vmem:[%s115] sm:$0xff]
        %v135 = vld [vmem:[%s115 + $0x8] sm:$0xff]
        %v136 = vmul.f32 %v134, 70.71068
        %v137 = vmul.f32 %v135, 70.71068
        %v138 = vlaneseq
        %v139 = vshrl.u32 %v138, 7
        %v140 = vadd.s32 %v139, 8
        %v141 = vlaneseq
        %v142 = vand.u32 %v141, 127
        %vm143 = vcmp.lt.s32.totalorder %v142, 0
        %v144 = vsub.s32 0, %v142
        %v145 = vsel %vm143, %v144, %v142
        %v146 = vshrl.u32 %v145, 4
        %v147 = vand.u32 %v145, 15
        %v148 = vsub.s32 0, %v147
        %v149 = vsel %vm143, %v148, %v147
        %vm150 = vcmp.ne.s32.totalorder %v149, 0
        %vm151 = vcmp.lt.s32.totalorder %v149, 0
        %vm152 = vmand %vm151, %vm150
        %v153 = vadd.s32 %v149, 16
        %v154 = vsel %vm152, %v153, %v149
        %v155 = vadd.s32 %v139, 4294967294
        %v156 = vadd.s32 %v140, 4294967294
        %vm157 = vcmp.ge.s32.totalorder %v155, 0
        %vm158 = vcmp.ge.s32.totalorder %v156, 0
        %vm159 = vcmp.lt.s32.totalorder %v155, 16
        %vm160 = vcmp.lt.s32.totalorder %v156, 16
        %vm161 = vmand %vm157, %vm159
        %vm162 = vmand %vm158, %vm160
        %v163 = vsel %vm161, 0.00033546262, 0.0
        %v164 = vsel %vm162, 0.00033546262, 0.0
        %v165 = vadd.s32 %v139, 4294967295
        %v166 = vadd.s32 %v140, 4294967295
        %vm167 = vcmp.ge.s32.totalorder %v165, 0
        %vm168 = vcmp.ge.s32.totalorder %v166, 0
        %vm169 = vcmp.lt.s32.totalorder %v165, 16
        %vm170 = vcmp.lt.s32.totalorder %v166, 16
        %vm171 = vmand %vm167, %vm169
        %vm172 = vmand %vm168, %vm170
        %v173 = vsel %vm171, 0.13533528, 0.0
        %v174 = vsel %vm172, 0.13533528, 0.0
        %vm175 = vcmp.ge.s32.totalorder %v139, 0
        %vm176 = vcmp.ge.s32.totalorder %v140, 0
        %vm177 = vcmp.lt.s32.totalorder %v139, 16
        %vm178 = vcmp.lt.s32.totalorder %v140, 16
        %vm179 = vmand %vm175, %vm177
        %vm180 = vmand %vm176, %vm178
        %v181 = vsel %vm179, 1.0, 0.0
        %v182 = vsel %vm180, 1.0, 0.0
        %v183 = vadd.s32 %v139, 1
        %v184 = vadd.s32 %v140, 1
        %vm185 = vcmp.ge.s32.totalorder %v183, 0
        %vm186 = vcmp.ge.s32.totalorder %v184, 0
        %vm187 = vcmp.lt.s32.totalorder %v183, 16
        %vm188 = vcmp.lt.s32.totalorder %v184, 16
        %vm189 = vmand %vm185, %vm187
        %vm190 = vmand %vm186, %vm188
        %v191 = vsel %vm189, 0.13533528, 0.0
        %v192 = vsel %vm190, 0.13533528, 0.0
        %v193 = vadd.s32 %v139, 2
        %v194 = vadd.s32 %v140, 2
        %vm195 = vcmp.ge.s32.totalorder %v193, 0
        %vm196 = vcmp.ge.s32.totalorder %v194, 0
        %vm197 = vcmp.lt.s32.totalorder %v193, 16
        %vm198 = vcmp.lt.s32.totalorder %v194, 16
        %vm199 = vmand %vm195, %vm197
        %vm200 = vmand %vm196, %vm198
        %v201 = vsel %vm199, 0.00033546262, 0.0
        %v202 = vsel %vm200, 0.00033546262, 0.0
        %v203 = vadd.s32 %v154, 4294967294
        %vm204 = vcmp.ge.s32.totalorder %v203, 0
        %vm205 = vcmp.lt.s32.totalorder %v203, 16
        %vm206 = vmand %vm204, %vm205
        %v207 = vsel %vm206, -8.0, -1000000.0
        %v208 = vadd.s32 %v154, 4294967295
        %vm209 = vcmp.ge.s32.totalorder %v208, 0
        %vm210 = vcmp.lt.s32.totalorder %v208, 16
        %vm211 = vmand %vm209, %vm210
        %v212 = vsel %vm211, -2.0, -1000000.0
        %v213 = vadd.s32 %v154, 1
        %vm214 = vcmp.ge.s32.totalorder %v213, 0
        %vm215 = vcmp.lt.s32.totalorder %v213, 16
        %vm216 = vmand %vm214, %vm215
        %v217 = vsel %vm216, -2.0, -1000000.0
        %v218 = vadd.s32 %v154, 2
        %vm219 = vcmp.ge.s32.totalorder %v218, 0
        %vm220 = vcmp.lt.s32.totalorder %v218, 16
        %vm221 = vmand %vm219, %vm220
        %v222 = vsel %vm221, -8.0, -1000000.0
        %v223 = vrot.slane %v136, 6
        %v224 = vrot.slane %v137, 6
        %vm225 = vcmp.lt.s32.totalorder %v139, 2
        %v226 = vsel %vm225, %v223, %v224
        %v227 = vsel %vm225, %v224, %v223
        %228 = vrot.lane.b32.xlu0 %v227, 2
        %v229 = vpop.permute.xlu0 %228
        %230 = vrot.lane.b32.xlu0 %v226, 2
        %v231 = vpop.permute.xlu0 %230
        %v232 = vsub.f32 %v136, %v229
        %v233 = vsub.f32 %v137, %v231
        %v234 = vmul.f32 %v232, %v232
        %v235 = vmul.f32 %v233, %v233
        %v236 = vsub.f32 %v207, %v234
        %v237 = vsub.f32 %v207, %v235
        %v238 = vmul.f32 %v236, 1.442695
        %v239 = vpow.pop %v238
        %v240 = vmul.f32 %v237, 1.442695
        %v241 = vpow.pop %v240
        %v242 = vmul.f32 %v239, %v229
        %v243 = vmul.f32 %v241, %v231
        %244 = vrot.lane.b32.xlu0 %v227, 1
        %v245 = vpop.permute.xlu0 %244
        %246 = vrot.lane.b32.xlu0 %v226, 1
        %v247 = vpop.permute.xlu0 %246
        %v248 = vsub.f32 %v136, %v245
        %v249 = vsub.f32 %v137, %v247
        %v250 = vmul.f32 %v248, %v248
        %v251 = vmul.f32 %v249, %v249
        %v252 = vsub.f32 %v212, %v250
        %v253 = vsub.f32 %v212, %v251
        %v254 = vmul.f32 %v252, 1.442695
        %v255 = vpow.pop %v254
        %v256 = vmul.f32 %v253, 1.442695
        %v257 = vpow.pop %v256
        %v258 = vmul.f32 %v255, %v245
        %v259 = vmul.f32 %v257, %v247
        %v260 = vadd.f32 %v242, %v258
        %v261 = vadd.f32 %v243, %v259
        %v262 = vadd.f32 %v239, %v255
        %v263 = vadd.f32 %v241, %v257
        %v264 = vsub.f32 %v136, %v227
        %v265 = vsub.f32 %v137, %v226
        %v266 = vmul.f32 %v264, %v264
        %v267 = vmul.f32 %v265, %v265
        %v268 = vsub.f32 0.0, %v266
        %v269 = vsub.f32 0.0, %v267
        %v270 = vmul.f32 %v268, 1.442695
        %v271 = vpow.pop %v270
        %v272 = vmul.f32 %v269, 1.442695
        %v273 = vpow.pop %v272
        %v274 = vmul.f32 %v271, %v227
        %v275 = vmul.f32 %v273, %v226
        %v276 = vadd.f32 %v260, %v274
        %v277 = vadd.f32 %v261, %v275
        %v278 = vadd.f32 %v262, %v271
        %v279 = vadd.f32 %v263, %v273
        %280 = vrot.lane.b32.xlu0 %v227, 127
        %v281 = vpop.permute.xlu0 %280
        %282 = vrot.lane.b32.xlu0 %v226, 127
        %v283 = vpop.permute.xlu0 %282
        %v284 = vsub.f32 %v136, %v281
        %v285 = vsub.f32 %v137, %v283
        %v286 = vmul.f32 %v284, %v284
        %v287 = vmul.f32 %v285, %v285
        %v288 = vsub.f32 %v217, %v286
        %v289 = vsub.f32 %v217, %v287
        %v290 = vmul.f32 %v288, 1.442695
        %v291 = vpow.pop %v290
        %v292 = vmul.f32 %v289, 1.442695
        %v293 = vpow.pop %v292
        %v294 = vmul.f32 %v291, %v281
        %v295 = vmul.f32 %v293, %v283
        %v296 = vadd.f32 %v276, %v294
        %v297 = vadd.f32 %v277, %v295
        %v298 = vadd.f32 %v278, %v291
        %v299 = vadd.f32 %v279, %v293
        %300 = vrot.lane.b32.xlu0 %v227, 126
        %v301 = vpop.permute.xlu0 %300
        %302 = vrot.lane.b32.xlu0 %v226, 126
        %v303 = vpop.permute.xlu0 %302
        %v304 = vsub.f32 %v136, %v301
        %v305 = vsub.f32 %v137, %v303
        %v306 = vmul.f32 %v304, %v304
        %v307 = vmul.f32 %v305, %v305
        %v308 = vsub.f32 %v222, %v306
        %v309 = vsub.f32 %v222, %v307
        %v310 = vmul.f32 %v308, 1.442695
        %v311 = vpow.pop %v310
        %v312 = vmul.f32 %v309, 1.442695
        %v313 = vpow.pop %v312
        %v314 = vmul.f32 %v311, %v301
        %v315 = vmul.f32 %v313, %v303
        %v316 = vadd.f32 %v296, %v314
        %v317 = vadd.f32 %v297, %v315
        %v318 = vadd.f32 %v298, %v311
        %v319 = vadd.f32 %v299, %v313
        %v320 = vmul.f32 %v163, %v316
        %v321 = vmul.f32 %v164, %v317
        %v322 = vmul.f32 %v163, %v318
        %v323 = vmul.f32 %v164, %v319
        %v324 = vrot.slane %v136, 7
        %v325 = vrot.slane %v137, 7
        %vm326 = vcmp.lt.s32.totalorder %v139, 1
        %v327 = vsel %vm326, %v324, %v325
        %v328 = vsel %vm326, %v325, %v324
        %329 = vrot.lane.b32.xlu0 %v328, 2
        %v330 = vpop.permute.xlu0 %329
        %331 = vrot.lane.b32.xlu0 %v327, 2
        %v332 = vpop.permute.xlu0 %331
        %v333 = vsub.f32 %v136, %v330
        %v334 = vsub.f32 %v137, %v332
        %v335 = vmul.f32 %v333, %v333
        %v336 = vmul.f32 %v334, %v334
        %v337 = vsub.f32 %v207, %v335
        %v338 = vsub.f32 %v207, %v336
        %v339 = vmul.f32 %v337, 1.442695
        %v340 = vpow.pop %v339
        %v341 = vmul.f32 %v338, 1.442695
        %v342 = vpow.pop %v341
        %v343 = vmul.f32 %v340, %v330
        %v344 = vmul.f32 %v342, %v332
        %345 = vrot.lane.b32.xlu0 %v328, 1
        %v346 = vpop.permute.xlu0 %345
        %347 = vrot.lane.b32.xlu0 %v327, 1
        %v348 = vpop.permute.xlu0 %347
        %v349 = vsub.f32 %v136, %v346
        %v350 = vsub.f32 %v137, %v348
        %v351 = vmul.f32 %v349, %v349
        %v352 = vmul.f32 %v350, %v350
        %v353 = vsub.f32 %v212, %v351
        %v354 = vsub.f32 %v212, %v352
        %v355 = vmul.f32 %v353, 1.442695
        %v356 = vpow.pop %v355
        %v357 = vmul.f32 %v354, 1.442695
        %v358 = vpow.pop %v357
        %v359 = vmul.f32 %v356, %v346
        %v360 = vmul.f32 %v358, %v348
        %v361 = vadd.f32 %v343, %v359
        %v362 = vadd.f32 %v344, %v360
        %v363 = vadd.f32 %v340, %v356
        %v364 = vadd.f32 %v342, %v358
        %v365 = vsub.f32 %v136, %v328
        %v366 = vsub.f32 %v137, %v327
        %v367 = vmul.f32 %v365, %v365
        %v368 = vmul.f32 %v366, %v366
        %v369 = vsub.f32 0.0, %v367
        %v370 = vsub.f32 0.0, %v368
        %v371 = vmul.f32 %v369, 1.442695
        %v372 = vpow.pop %v371
        %v373 = vmul.f32 %v370, 1.442695
        %v374 = vpow.pop %v373
        %v375 = vmul.f32 %v372, %v328
        %v376 = vmul.f32 %v374, %v327
        %v377 = vadd.f32 %v361, %v375
        %v378 = vadd.f32 %v362, %v376
        %v379 = vadd.f32 %v363, %v372
        %v380 = vadd.f32 %v364, %v374
        %381 = vrot.lane.b32.xlu0 %v328, 127
        %v382 = vpop.permute.xlu0 %381
        %383 = vrot.lane.b32.xlu0 %v327, 127
        %v384 = vpop.permute.xlu0 %383
        %v385 = vsub.f32 %v136, %v382
        %v386 = vsub.f32 %v137, %v384
        %v387 = vmul.f32 %v385, %v385
        %v388 = vmul.f32 %v386, %v386
        %v389 = vsub.f32 %v217, %v387
        %v390 = vsub.f32 %v217, %v388
        %v391 = vmul.f32 %v389, 1.442695
        %v392 = vpow.pop %v391
        %v393 = vmul.f32 %v390, 1.442695
        %v394 = vpow.pop %v393
        %v395 = vmul.f32 %v392, %v382
        %v396 = vmul.f32 %v394, %v384
        %v397 = vadd.f32 %v377, %v395
        %v398 = vadd.f32 %v378, %v396
        %v399 = vadd.f32 %v379, %v392
        %v400 = vadd.f32 %v380, %v394
        %401 = vrot.lane.b32.xlu0 %v328, 126
        %v402 = vpop.permute.xlu0 %401
        %403 = vrot.lane.b32.xlu0 %v327, 126
        %v404 = vpop.permute.xlu0 %403
        %v405 = vsub.f32 %v136, %v402
        %v406 = vsub.f32 %v137, %v404
        %v407 = vmul.f32 %v405, %v405
        %v408 = vmul.f32 %v406, %v406
        %v409 = vsub.f32 %v222, %v407
        %v410 = vsub.f32 %v222, %v408
        %v411 = vmul.f32 %v409, 1.442695
        %v412 = vpow.pop %v411
        %v413 = vmul.f32 %v410, 1.442695
        %v414 = vpow.pop %v413
        %v415 = vmul.f32 %v412, %v402
        %v416 = vmul.f32 %v414, %v404
        %v417 = vadd.f32 %v397, %v415
        %v418 = vadd.f32 %v398, %v416
        %v419 = vadd.f32 %v399, %v412
        %v420 = vadd.f32 %v400, %v414
        %v421 = vmul.f32 %v173, %v417
        %v422 = vmul.f32 %v174, %v418
        %v423 = vmul.f32 %v173, %v419
        %v424 = vmul.f32 %v174, %v420
        %425 = vrot.lane.b32.xlu0 %v136, 2
        %v426 = vpop.permute.xlu0 %425
        %427 = vrot.lane.b32.xlu0 %v137, 2
        %v428 = vpop.permute.xlu0 %427
        %v429 = vsub.f32 %v136, %v426
        %v430 = vsub.f32 %v137, %v428
        %v431 = vmul.f32 %v429, %v429
        %v432 = vmul.f32 %v430, %v430
        %v433 = vsub.f32 %v207, %v431
        %v434 = vsub.f32 %v207, %v432
        %v435 = vmul.f32 %v433, 1.442695
        %v436 = vpow.pop %v435
        %v437 = vmul.f32 %v434, 1.442695
        %v438 = vpow.pop %v437
        %v439 = vmul.f32 %v436, %v426
        %v440 = vmul.f32 %v438, %v428
        %441 = vrot.lane.b32.xlu0 %v136, 1
        %v442 = vpop.permute.xlu0 %441
        %443 = vrot.lane.b32.xlu0 %v137, 1
        %v444 = vpop.permute.xlu0 %443
        %v445 = vsub.f32 %v136, %v442
        %v446 = vsub.f32 %v137, %v444
        %v447 = vmul.f32 %v445, %v445
        %v448 = vmul.f32 %v446, %v446
        %v449 = vsub.f32 %v212, %v447
        %v450 = vsub.f32 %v212, %v448
        %v451 = vmul.f32 %v449, 1.442695
        %v452 = vpow.pop %v451
        %v453 = vmul.f32 %v450, 1.442695
        %v454 = vpow.pop %v453
        %v455 = vmul.f32 %v452, %v442
        %v456 = vmul.f32 %v454, %v444
        %v457 = vadd.f32 %v439, %v455
        %v458 = vadd.f32 %v440, %v456
        %v459 = vadd.f32 %v436, %v452
        %v460 = vadd.f32 %v438, %v454
        %v461 = vsub.f32 %v136, %v136
        %v462 = vsub.f32 %v137, %v137
        %v463 = vmul.f32 %v461, %v461
        %v464 = vmul.f32 %v462, %v462
        %v465 = vsub.f32 0.0, %v463
        %v466 = vsub.f32 0.0, %v464
        %v467 = vmul.f32 %v465, 1.442695
        %v468 = vpow.pop %v467
        %v469 = vmul.f32 %v466, 1.442695
        %v470 = vpow.pop %v469
        %v471 = vmul.f32 %v468, %v136
        %v472 = vmul.f32 %v470, %v137
        %v473 = vadd.f32 %v457, %v471
        %v474 = vadd.f32 %v458, %v472
        %v475 = vadd.f32 %v459, %v468
        %v476 = vadd.f32 %v460, %v470
        %477 = vrot.lane.b32.xlu0 %v136, 127
        %v478 = vpop.permute.xlu0 %477
        %479 = vrot.lane.b32.xlu0 %v137, 127
        %v480 = vpop.permute.xlu0 %479
        %v481 = vsub.f32 %v136, %v478
        %v482 = vsub.f32 %v137, %v480
        %v483 = vmul.f32 %v481, %v481
        %v484 = vmul.f32 %v482, %v482
        %v485 = vsub.f32 %v217, %v483
        %v486 = vsub.f32 %v217, %v484
        %v487 = vmul.f32 %v485, 1.442695
        %v488 = vpow.pop %v487
        %v489 = vmul.f32 %v486, 1.442695
        %v490 = vpow.pop %v489
        %v491 = vmul.f32 %v488, %v478
        %v492 = vmul.f32 %v490, %v480
        %v493 = vadd.f32 %v473, %v491
        %v494 = vadd.f32 %v474, %v492
        %v495 = vadd.f32 %v475, %v488
        %v496 = vadd.f32 %v476, %v490
        %497 = vrot.lane.b32.xlu0 %v136, 126
        %v498 = vpop.permute.xlu0 %497
        %499 = vrot.lane.b32.xlu0 %v137, 126
        %v500 = vpop.permute.xlu0 %499
        %v501 = vsub.f32 %v136, %v498
        %v502 = vsub.f32 %v137, %v500
        %v503 = vmul.f32 %v501, %v501
        %v504 = vmul.f32 %v502, %v502
        %v505 = vsub.f32 %v222, %v503
        %v506 = vsub.f32 %v222, %v504
        %v507 = vmul.f32 %v505, 1.442695
        %v508 = vpow.pop %v507
        %v509 = vmul.f32 %v506, 1.442695
        %v510 = vpow.pop %v509
        %v511 = vmul.f32 %v508, %v498
        %v512 = vmul.f32 %v510, %v500
        %v513 = vadd.f32 %v493, %v511
        %v514 = vadd.f32 %v494, %v512
        %v515 = vadd.f32 %v495, %v508
        %v516 = vadd.f32 %v496, %v510
        %v517 = vmul.f32 %v181, %v513
        %v518 = vmul.f32 %v182, %v514
        %v519 = vmul.f32 %v181, %v515
        %v520 = vmul.f32 %v182, %v516
        %v521 = vrot.slane %v136, 1
        %v522 = vrot.slane %v137, 1
        %vm523 = vcmp.lt.s32.totalorder %v139, 7
        %v524 = vsel %vm523, %v521, %v522
        %v525 = vsel %vm523, %v522, %v521
        %526 = vrot.lane.b32.xlu0 %v524, 2
        %v527 = vpop.permute.xlu0 %526
        %528 = vrot.lane.b32.xlu0 %v525, 2
        %v529 = vpop.permute.xlu0 %528
        %v530 = vsub.f32 %v136, %v527
        %v531 = vsub.f32 %v137, %v529
        %v532 = vmul.f32 %v530, %v530
        %v533 = vmul.f32 %v531, %v531
        %v534 = vsub.f32 %v207, %v532
        %v535 = vsub.f32 %v207, %v533
        %v536 = vmul.f32 %v534, 1.442695
        %v537 = vpow.pop %v536
        %v538 = vmul.f32 %v535, 1.442695
        %v539 = vpow.pop %v538
        %v540 = vmul.f32 %v537, %v527
        %v541 = vmul.f32 %v539, %v529
        %542 = vrot.lane.b32.xlu0 %v524, 1
        %v543 = vpop.permute.xlu0 %542
        %544 = vrot.lane.b32.xlu0 %v525, 1
        %v545 = vpop.permute.xlu0 %544
        %v546 = vsub.f32 %v136, %v543
        %v547 = vsub.f32 %v137, %v545
        %v548 = vmul.f32 %v546, %v546
        %v549 = vmul.f32 %v547, %v547
        %v550 = vsub.f32 %v212, %v548
        %v551 = vsub.f32 %v212, %v549
        %v552 = vmul.f32 %v550, 1.442695
        %v553 = vpow.pop %v552
        %v554 = vmul.f32 %v551, 1.442695
        %v555 = vpow.pop %v554
        %v556 = vmul.f32 %v553, %v543
        %v557 = vmul.f32 %v555, %v545
        %v558 = vadd.f32 %v540, %v556
        %v559 = vadd.f32 %v541, %v557
        %v560 = vadd.f32 %v537, %v553
        %v561 = vadd.f32 %v539, %v555
        %v562 = vsub.f32 %v136, %v524
        %v563 = vsub.f32 %v137, %v525
        %v564 = vmul.f32 %v562, %v562
        %v565 = vmul.f32 %v563, %v563
        %v566 = vsub.f32 0.0, %v564
        %v567 = vsub.f32 0.0, %v565
        %v568 = vmul.f32 %v566, 1.442695
        %v569 = vpow.pop %v568
        %v570 = vmul.f32 %v567, 1.442695
        %v571 = vpow.pop %v570
        %v572 = vmul.f32 %v569, %v524
        %v573 = vmul.f32 %v571, %v525
        %v574 = vadd.f32 %v558, %v572
        %v575 = vadd.f32 %v559, %v573
        %v576 = vadd.f32 %v560, %v569
        %v577 = vadd.f32 %v561, %v571
        %578 = vrot.lane.b32.xlu0 %v524, 127
        %v579 = vpop.permute.xlu0 %578
        %580 = vrot.lane.b32.xlu0 %v525, 127
        %v581 = vpop.permute.xlu0 %580
        %v582 = vsub.f32 %v136, %v579
        %v583 = vsub.f32 %v137, %v581
        %v584 = vmul.f32 %v582, %v582
        %v585 = vmul.f32 %v583, %v583
        %v586 = vsub.f32 %v217, %v584
        %v587 = vsub.f32 %v217, %v585
        %v588 = vmul.f32 %v586, 1.442695
        %v589 = vpow.pop %v588
        %v590 = vmul.f32 %v587, 1.442695
        %v591 = vpow.pop %v590
        %v592 = vmul.f32 %v589, %v579
        %v593 = vmul.f32 %v591, %v581
        %v594 = vadd.f32 %v574, %v592
        %v595 = vadd.f32 %v575, %v593
        %v596 = vadd.f32 %v576, %v589
        %v597 = vadd.f32 %v577, %v591
        %598 = vrot.lane.b32.xlu0 %v524, 126
        %v599 = vpop.permute.xlu0 %598
        %600 = vrot.lane.b32.xlu0 %v525, 126
        %v601 = vpop.permute.xlu0 %600
        %v602 = vsub.f32 %v136, %v599
        %v603 = vsub.f32 %v137, %v601
        %v604 = vmul.f32 %v602, %v602
        %v605 = vmul.f32 %v603, %v603
        %v606 = vsub.f32 %v222, %v604
        %v607 = vsub.f32 %v222, %v605
        %v608 = vmul.f32 %v606, 1.442695
        %v609 = vpow.pop %v608
        %v610 = vmul.f32 %v607, 1.442695
        %v611 = vpow.pop %v610
        %v612 = vmul.f32 %v609, %v599
        %v613 = vmul.f32 %v611, %v601
        %v614 = vadd.f32 %v594, %v612
        %v615 = vadd.f32 %v595, %v613
        %v616 = vadd.f32 %v596, %v609
        %v617 = vadd.f32 %v597, %v611
        %v618 = vmul.f32 %v191, %v614
        %v619 = vmul.f32 %v192, %v615
        %v620 = vmul.f32 %v191, %v616
        %v621 = vmul.f32 %v192, %v617
        %v622 = vrot.slane %v136, 2
        %v623 = vrot.slane %v137, 2
        %vm624 = vcmp.lt.s32.totalorder %v139, 6
        %v625 = vsel %vm624, %v622, %v623
        %v626 = vsel %vm624, %v623, %v622
        %627 = vrot.lane.b32.xlu0 %v625, 2
        %v628 = vpop.permute.xlu0 %627
        %629 = vrot.lane.b32.xlu0 %v626, 2
        %v630 = vpop.permute.xlu0 %629
        %v631 = vsub.f32 %v136, %v628
        %v632 = vsub.f32 %v137, %v630
        %v633 = vmul.f32 %v631, %v631
        %v634 = vmul.f32 %v632, %v632
        %v635 = vsub.f32 %v207, %v633
        %v636 = vsub.f32 %v207, %v634
        %v637 = vmul.f32 %v635, 1.442695
        %v638 = vpow.pop %v637
        %v639 = vmul.f32 %v636, 1.442695
        %v640 = vpow.pop %v639
        %v641 = vmul.f32 %v638, %v628
        %v642 = vmul.f32 %v640, %v630
        %643 = vrot.lane.b32.xlu0 %v625, 1
        %v644 = vpop.permute.xlu0 %643
        %645 = vrot.lane.b32.xlu0 %v626, 1
        %v646 = vpop.permute.xlu0 %645
        %v647 = vsub.f32 %v136, %v644
        %v648 = vsub.f32 %v137, %v646
        %v649 = vmul.f32 %v647, %v647
        %v650 = vmul.f32 %v648, %v648
        %v651 = vsub.f32 %v212, %v649
        %v652 = vsub.f32 %v212, %v650
        %v653 = vmul.f32 %v651, 1.442695
        %v654 = vpow.pop %v653
        %v655 = vmul.f32 %v652, 1.442695
        %v656 = vpow.pop %v655
        %v657 = vmul.f32 %v654, %v644
        %v658 = vmul.f32 %v656, %v646
        %v659 = vadd.f32 %v641, %v657
        %v660 = vadd.f32 %v642, %v658
        %v661 = vadd.f32 %v638, %v654
        %v662 = vadd.f32 %v640, %v656
        %v663 = vsub.f32 %v136, %v625
        %v664 = vsub.f32 %v137, %v626
        %v665 = vmul.f32 %v663, %v663
        %v666 = vmul.f32 %v664, %v664
        %v667 = vsub.f32 0.0, %v665
        %v668 = vsub.f32 0.0, %v666
        %v669 = vmul.f32 %v667, 1.442695
        %v670 = vpow.pop %v669
        %v671 = vmul.f32 %v668, 1.442695
        %v672 = vpow.pop %v671
        %v673 = vmul.f32 %v670, %v625
        %v674 = vmul.f32 %v672, %v626
        %v675 = vadd.f32 %v659, %v673
        %v676 = vadd.f32 %v660, %v674
        %v677 = vadd.f32 %v661, %v670
        %v678 = vadd.f32 %v662, %v672
        %679 = vrot.lane.b32.xlu0 %v625, 127
        %v680 = vpop.permute.xlu0 %679
        %681 = vrot.lane.b32.xlu0 %v626, 127
        %v682 = vpop.permute.xlu0 %681
        %v683 = vsub.f32 %v136, %v680
        %v684 = vsub.f32 %v137, %v682
        %v685 = vmul.f32 %v683, %v683
        %v686 = vmul.f32 %v684, %v684
        %v687 = vsub.f32 %v217, %v685
        %v688 = vsub.f32 %v217, %v686
        %v689 = vmul.f32 %v687, 1.442695
        %v690 = vpow.pop %v689
        %v691 = vmul.f32 %v688, 1.442695
        %v692 = vpow.pop %v691
        %v693 = vmul.f32 %v690, %v680
        %v694 = vmul.f32 %v692, %v682
        %v695 = vadd.f32 %v675, %v693
        %v696 = vadd.f32 %v676, %v694
        %v697 = vadd.f32 %v677, %v690
        %v698 = vadd.f32 %v678, %v692
        %699 = vrot.lane.b32.xlu0 %v625, 126
        %v700 = vpop.permute.xlu0 %699
        %701 = vrot.lane.b32.xlu0 %v626, 126
        %v702 = vpop.permute.xlu0 %701
        %v703 = vsub.f32 %v136, %v700
        %v704 = vsub.f32 %v137, %v702
        %v705 = vmul.f32 %v703, %v703
        %v706 = vmul.f32 %v704, %v704
        %v707 = vsub.f32 %v222, %v705
        %v708 = vsub.f32 %v222, %v706
        %v709 = vmul.f32 %v707, 1.442695
        %v710 = vpow.pop %v709
        %v711 = vmul.f32 %v708, 1.442695
        %v712 = vpow.pop %v711
        %v713 = vmul.f32 %v710, %v700
        %v714 = vmul.f32 %v712, %v702
        %v715 = vadd.f32 %v695, %v713
        %v716 = vadd.f32 %v696, %v714
        %v717 = vadd.f32 %v697, %v710
        %v718 = vadd.f32 %v698, %v712
        %v719 = vmul.f32 %v201, %v715
        %v720 = vmul.f32 %v202, %v716
        %v721 = vmul.f32 %v201, %v717
        %v722 = vmul.f32 %v202, %v718
        %v723 = vadd.f32 %v320, %v421
        %v724 = vadd.f32 %v321, %v422
        %v725 = vadd.f32 %v517, %v618
        %v726 = vadd.f32 %v518, %v619
        %v727 = vadd.f32 %v723, %v725
        %v728 = vadd.f32 %v724, %v726
        %v729 = vadd.f32 %v727, %v719
        %v730 = vadd.f32 %v728, %v720
        %v731 = vadd.f32 %v322, %v423
        %v732 = vadd.f32 %v323, %v424
        %v733 = vadd.f32 %v519, %v620
        %v734 = vadd.f32 %v520, %v621
        %v735 = vadd.f32 %v731, %v733
        %v736 = vadd.f32 %v732, %v734
        %v737 = vadd.f32 %v735, %v721
        %v738 = vadd.f32 %v736, %v722
        %v739 = vrcp.pop %v737
        %v740 = vrcp.pop %v738
        %v741 = vmul.f32 %v729, %v739
        %v742 = vmul.f32 %v730, %v740
        %v743 = vrot.slane %v741, 6
        %v744 = vrot.slane %v742, 6
        %v745 = vsel %vm225, %v743, %v744
        %v746 = vsel %vm225, %v744, %v743
        %747 = vrot.lane.b32.xlu0 %v746, 2
        %v748 = vpop.permute.xlu0 %747
        %749 = vrot.lane.b32.xlu0 %v745, 2
        %v750 = vpop.permute.xlu0 %749
        %v751 = vsub.f32 %v741, %v748
        %v752 = vsub.f32 %v742, %v750
        %v753 = vmul.f32 %v751, %v751
        %v754 = vmul.f32 %v752, %v752
        %v755 = vsub.f32 %v207, %v753
        %v756 = vsub.f32 %v207, %v754
        %v757 = vmul.f32 %v755, 1.442695
        %v758 = vpow.pop %v757
        %v759 = vmul.f32 %v756, 1.442695
        %v760 = vpow.pop %v759
        %v761 = vmul.f32 %v758, %v748
        %v762 = vmul.f32 %v760, %v750
        %763 = vrot.lane.b32.xlu0 %v746, 1
        %v764 = vpop.permute.xlu0 %763
        %765 = vrot.lane.b32.xlu0 %v745, 1
        %v766 = vpop.permute.xlu0 %765
        %v767 = vsub.f32 %v741, %v764
        %v768 = vsub.f32 %v742, %v766
        %v769 = vmul.f32 %v767, %v767
        %v770 = vmul.f32 %v768, %v768
        %v771 = vsub.f32 %v212, %v769
        %v772 = vsub.f32 %v212, %v770
        %v773 = vmul.f32 %v771, 1.442695
        %v774 = vpow.pop %v773
        %v775 = vmul.f32 %v772, 1.442695
        %v776 = vpow.pop %v775
        %v777 = vmul.f32 %v774, %v764
        %v778 = vmul.f32 %v776, %v766
        %v779 = vadd.f32 %v761, %v777
        %v780 = vadd.f32 %v762, %v778
        %v781 = vadd.f32 %v758, %v774
        %v782 = vadd.f32 %v760, %v776
        %v783 = vsub.f32 %v741, %v746
        %v784 = vsub.f32 %v742, %v745
        %v785 = vmul.f32 %v783, %v783
        %v786 = vmul.f32 %v784, %v784
        %v787 = vsub.f32 0.0, %v785
        %v788 = vsub.f32 0.0, %v786
        %v789 = vmul.f32 %v787, 1.442695
        %v790 = vpow.pop %v789
        %v791 = vmul.f32 %v788, 1.442695
        %v792 = vpow.pop %v791
        %v793 = vmul.f32 %v790, %v746
        %v794 = vmul.f32 %v792, %v745
        %v795 = vadd.f32 %v779, %v793
        %v796 = vadd.f32 %v780, %v794
        %v797 = vadd.f32 %v781, %v790
        %v798 = vadd.f32 %v782, %v792
        %799 = vrot.lane.b32.xlu0 %v746, 127
        %v800 = vpop.permute.xlu0 %799
        %801 = vrot.lane.b32.xlu0 %v745, 127
        %v802 = vpop.permute.xlu0 %801
        %v803 = vsub.f32 %v741, %v800
        %v804 = vsub.f32 %v742, %v802
        %v805 = vmul.f32 %v803, %v803
        %v806 = vmul.f32 %v804, %v804
        %v807 = vsub.f32 %v217, %v805
        %v808 = vsub.f32 %v217, %v806
        %v809 = vmul.f32 %v807, 1.442695
        %v810 = vpow.pop %v809
        %v811 = vmul.f32 %v808, 1.442695
        %v812 = vpow.pop %v811
        %v813 = vmul.f32 %v810, %v800
        %v814 = vmul.f32 %v812, %v802
        %v815 = vadd.f32 %v795, %v813
        %v816 = vadd.f32 %v796, %v814
        %v817 = vadd.f32 %v797, %v810
        %v818 = vadd.f32 %v798, %v812
        %819 = vrot.lane.b32.xlu0 %v746, 126
        %v820 = vpop.permute.xlu0 %819
        %821 = vrot.lane.b32.xlu0 %v745, 126
        %v822 = vpop.permute.xlu0 %821
        %v823 = vsub.f32 %v741, %v820
        %v824 = vsub.f32 %v742, %v822
        %v825 = vmul.f32 %v823, %v823
        %v826 = vmul.f32 %v824, %v824
        %v827 = vsub.f32 %v222, %v825
        %v828 = vsub.f32 %v222, %v826
        %v829 = vmul.f32 %v827, 1.442695
        %v830 = vpow.pop %v829
        %v831 = vmul.f32 %v828, 1.442695
        %v832 = vpow.pop %v831
        %v833 = vmul.f32 %v830, %v820
        %v834 = vmul.f32 %v832, %v822
        %v835 = vadd.f32 %v815, %v833
        %v836 = vadd.f32 %v816, %v834
        %v837 = vadd.f32 %v817, %v830
        %v838 = vadd.f32 %v818, %v832
        %v839 = vmul.f32 %v163, %v835
        %v840 = vmul.f32 %v164, %v836
        %v841 = vmul.f32 %v163, %v837
        %v842 = vmul.f32 %v164, %v838
        %v843 = vrot.slane %v741, 7
        %v844 = vrot.slane %v742, 7
        %v845 = vsel %vm326, %v843, %v844
        %v846 = vsel %vm326, %v844, %v843
        %847 = vrot.lane.b32.xlu0 %v846, 2
        %v848 = vpop.permute.xlu0 %847
        %849 = vrot.lane.b32.xlu0 %v845, 2
        %v850 = vpop.permute.xlu0 %849
        %v851 = vsub.f32 %v741, %v848
        %v852 = vsub.f32 %v742, %v850
        %v853 = vmul.f32 %v851, %v851
        %v854 = vmul.f32 %v852, %v852
        %v855 = vsub.f32 %v207, %v853
        %v856 = vsub.f32 %v207, %v854
        %v857 = vmul.f32 %v855, 1.442695
        %v858 = vpow.pop %v857
        %v859 = vmul.f32 %v856, 1.442695
        %v860 = vpow.pop %v859
        %v861 = vmul.f32 %v858, %v848
        %v862 = vmul.f32 %v860, %v850
        %863 = vrot.lane.b32.xlu0 %v846, 1
        %v864 = vpop.permute.xlu0 %863
        %865 = vrot.lane.b32.xlu0 %v845, 1
        %v866 = vpop.permute.xlu0 %865
        %v867 = vsub.f32 %v741, %v864
        %v868 = vsub.f32 %v742, %v866
        %v869 = vmul.f32 %v867, %v867
        %v870 = vmul.f32 %v868, %v868
        %v871 = vsub.f32 %v212, %v869
        %v872 = vsub.f32 %v212, %v870
        %v873 = vmul.f32 %v871, 1.442695
        %v874 = vpow.pop %v873
        %v875 = vmul.f32 %v872, 1.442695
        %v876 = vpow.pop %v875
        %v877 = vmul.f32 %v874, %v864
        %v878 = vmul.f32 %v876, %v866
        %v879 = vadd.f32 %v861, %v877
        %v880 = vadd.f32 %v862, %v878
        %v881 = vadd.f32 %v858, %v874
        %v882 = vadd.f32 %v860, %v876
        %v883 = vsub.f32 %v741, %v846
        %v884 = vsub.f32 %v742, %v845
        %v885 = vmul.f32 %v883, %v883
        %v886 = vmul.f32 %v884, %v884
        %v887 = vsub.f32 0.0, %v885
        %v888 = vsub.f32 0.0, %v886
        %v889 = vmul.f32 %v887, 1.442695
        %v890 = vpow.pop %v889
        %v891 = vmul.f32 %v888, 1.442695
        %v892 = vpow.pop %v891
        %v893 = vmul.f32 %v890, %v846
        %v894 = vmul.f32 %v892, %v845
        %v895 = vadd.f32 %v879, %v893
        %v896 = vadd.f32 %v880, %v894
        %v897 = vadd.f32 %v881, %v890
        %v898 = vadd.f32 %v882, %v892
        %899 = vrot.lane.b32.xlu0 %v846, 127
        %v900 = vpop.permute.xlu0 %899
        %901 = vrot.lane.b32.xlu0 %v845, 127
        %v902 = vpop.permute.xlu0 %901
        %v903 = vsub.f32 %v741, %v900
        %v904 = vsub.f32 %v742, %v902
        %v905 = vmul.f32 %v903, %v903
        %v906 = vmul.f32 %v904, %v904
        %v907 = vsub.f32 %v217, %v905
        %v908 = vsub.f32 %v217, %v906
        %v909 = vmul.f32 %v907, 1.442695
        %v910 = vpow.pop %v909
        %v911 = vmul.f32 %v908, 1.442695
        %v912 = vpow.pop %v911
        %v913 = vmul.f32 %v910, %v900
        %v914 = vmul.f32 %v912, %v902
        %v915 = vadd.f32 %v895, %v913
        %v916 = vadd.f32 %v896, %v914
        %v917 = vadd.f32 %v897, %v910
        %v918 = vadd.f32 %v898, %v912
        %919 = vrot.lane.b32.xlu0 %v846, 126
        %v920 = vpop.permute.xlu0 %919
        %921 = vrot.lane.b32.xlu0 %v845, 126
        %v922 = vpop.permute.xlu0 %921
        %v923 = vsub.f32 %v741, %v920
        %v924 = vsub.f32 %v742, %v922
        %v925 = vmul.f32 %v923, %v923
        %v926 = vmul.f32 %v924, %v924
        %v927 = vsub.f32 %v222, %v925
        %v928 = vsub.f32 %v222, %v926
        %v929 = vmul.f32 %v927, 1.442695
        %v930 = vpow.pop %v929
        %v931 = vmul.f32 %v928, 1.442695
        %v932 = vpow.pop %v931
        %v933 = vmul.f32 %v930, %v920
        %v934 = vmul.f32 %v932, %v922
        %v935 = vadd.f32 %v915, %v933
        %v936 = vadd.f32 %v916, %v934
        %v937 = vadd.f32 %v917, %v930
        %v938 = vadd.f32 %v918, %v932
        %v939 = vmul.f32 %v173, %v935
        %v940 = vmul.f32 %v174, %v936
        %v941 = vmul.f32 %v173, %v937
        %v942 = vmul.f32 %v174, %v938
        %943 = vrot.lane.b32.xlu0 %v741, 2
        %v944 = vpop.permute.xlu0 %943
        %945 = vrot.lane.b32.xlu0 %v742, 2
        %v946 = vpop.permute.xlu0 %945
        %v947 = vsub.f32 %v741, %v944
        %v948 = vsub.f32 %v742, %v946
        %v949 = vmul.f32 %v947, %v947
        %v950 = vmul.f32 %v948, %v948
        %v951 = vsub.f32 %v207, %v949
        %v952 = vsub.f32 %v207, %v950
        %v953 = vmul.f32 %v951, 1.442695
        %v954 = vpow.pop %v953
        %v955 = vmul.f32 %v952, 1.442695
        %v956 = vpow.pop %v955
        %v957 = vmul.f32 %v954, %v944
        %v958 = vmul.f32 %v956, %v946
        %959 = vrot.lane.b32.xlu0 %v741, 1
        %v960 = vpop.permute.xlu0 %959
        %961 = vrot.lane.b32.xlu0 %v742, 1
        %v962 = vpop.permute.xlu0 %961
        %v963 = vsub.f32 %v741, %v960
        %v964 = vsub.f32 %v742, %v962
        %v965 = vmul.f32 %v963, %v963
        %v966 = vmul.f32 %v964, %v964
        %v967 = vsub.f32 %v212, %v965
        %v968 = vsub.f32 %v212, %v966
        %v969 = vmul.f32 %v967, 1.442695
        %v970 = vpow.pop %v969
        %v971 = vmul.f32 %v968, 1.442695
        %v972 = vpow.pop %v971
        %v973 = vmul.f32 %v970, %v960
        %v974 = vmul.f32 %v972, %v962
        %v975 = vadd.f32 %v957, %v973
        %v976 = vadd.f32 %v958, %v974
        %v977 = vadd.f32 %v954, %v970
        %v978 = vadd.f32 %v956, %v972
        %v979 = vsub.f32 %v741, %v741
        %v980 = vsub.f32 %v742, %v742
        %v981 = vmul.f32 %v979, %v979
        %v982 = vmul.f32 %v980, %v980
        %v983 = vsub.f32 0.0, %v981
        %v984 = vsub.f32 0.0, %v982
        %v985 = vmul.f32 %v983, 1.442695
        %v986 = vpow.pop %v985
        %v987 = vmul.f32 %v984, 1.442695
        %v988 = vpow.pop %v987
        %v989 = vmul.f32 %v986, %v741
        %v990 = vmul.f32 %v988, %v742
        %v991 = vadd.f32 %v975, %v989
        %v992 = vadd.f32 %v976, %v990
        %v993 = vadd.f32 %v977, %v986
        %v994 = vadd.f32 %v978, %v988
        %995 = vrot.lane.b32.xlu0 %v741, 127
        %v996 = vpop.permute.xlu0 %995
        %997 = vrot.lane.b32.xlu0 %v742, 127
        %v998 = vpop.permute.xlu0 %997
        %v999 = vsub.f32 %v741, %v996
        %v1000 = vsub.f32 %v742, %v998
        %v1001 = vmul.f32 %v999, %v999
        %v1002 = vmul.f32 %v1000, %v1000
        %v1003 = vsub.f32 %v217, %v1001
        %v1004 = vsub.f32 %v217, %v1002
        %v1005 = vmul.f32 %v1003, 1.442695
        %v1006 = vpow.pop %v1005
        %v1007 = vmul.f32 %v1004, 1.442695
        %v1008 = vpow.pop %v1007
        %v1009 = vmul.f32 %v1006, %v996
        %v1010 = vmul.f32 %v1008, %v998
        %v1011 = vadd.f32 %v991, %v1009
        %v1012 = vadd.f32 %v992, %v1010
        %v1013 = vadd.f32 %v993, %v1006
        %v1014 = vadd.f32 %v994, %v1008
        %1015 = vrot.lane.b32.xlu0 %v741, 126
        %v1016 = vpop.permute.xlu0 %1015
        %1017 = vrot.lane.b32.xlu0 %v742, 126
        %v1018 = vpop.permute.xlu0 %1017
        %v1019 = vsub.f32 %v741, %v1016
        %v1020 = vsub.f32 %v742, %v1018
        %v1021 = vmul.f32 %v1019, %v1019
        %v1022 = vmul.f32 %v1020, %v1020
        %v1023 = vsub.f32 %v222, %v1021
        %v1024 = vsub.f32 %v222, %v1022
        %v1025 = vmul.f32 %v1023, 1.442695
        %v1026 = vpow.pop %v1025
        %v1027 = vmul.f32 %v1024, 1.442695
        %v1028 = vpow.pop %v1027
        %v1029 = vmul.f32 %v1026, %v1016
        %v1030 = vmul.f32 %v1028, %v1018
        %v1031 = vadd.f32 %v1011, %v1029
        %v1032 = vadd.f32 %v1012, %v1030
        %v1033 = vadd.f32 %v1013, %v1026
        %v1034 = vadd.f32 %v1014, %v1028
        %v1035 = vmul.f32 %v181, %v1031
        %v1036 = vmul.f32 %v182, %v1032
        %v1037 = vmul.f32 %v181, %v1033
        %v1038 = vmul.f32 %v182, %v1034
        %v1039 = vrot.slane %v741, 1
        %v1040 = vrot.slane %v742, 1
        %v1041 = vsel %vm523, %v1039, %v1040
        %v1042 = vsel %vm523, %v1040, %v1039
        %1043 = vrot.lane.b32.xlu0 %v1041, 2
        %v1044 = vpop.permute.xlu0 %1043
        %1045 = vrot.lane.b32.xlu0 %v1042, 2
        %v1046 = vpop.permute.xlu0 %1045
        %v1047 = vsub.f32 %v741, %v1044
        %v1048 = vsub.f32 %v742, %v1046
        %v1049 = vmul.f32 %v1047, %v1047
        %v1050 = vmul.f32 %v1048, %v1048
        %v1051 = vsub.f32 %v207, %v1049
        %v1052 = vsub.f32 %v207, %v1050
        %v1053 = vmul.f32 %v1051, 1.442695
        %v1054 = vpow.pop %v1053
        %v1055 = vmul.f32 %v1052, 1.442695
        %v1056 = vpow.pop %v1055
        %v1057 = vmul.f32 %v1054, %v1044
        %v1058 = vmul.f32 %v1056, %v1046
        %1059 = vrot.lane.b32.xlu0 %v1041, 1
        %v1060 = vpop.permute.xlu0 %1059
        %1061 = vrot.lane.b32.xlu0 %v1042, 1
        %v1062 = vpop.permute.xlu0 %1061
        %v1063 = vsub.f32 %v741, %v1060
        %v1064 = vsub.f32 %v742, %v1062
        %v1065 = vmul.f32 %v1063, %v1063
        %v1066 = vmul.f32 %v1064, %v1064
        %v1067 = vsub.f32 %v212, %v1065
        %v1068 = vsub.f32 %v212, %v1066
        %v1069 = vmul.f32 %v1067, 1.442695
        %v1070 = vpow.pop %v1069
        %v1071 = vmul.f32 %v1068, 1.442695
        %v1072 = vpow.pop %v1071
        %v1073 = vmul.f32 %v1070, %v1060
        %v1074 = vmul.f32 %v1072, %v1062
        %v1075 = vadd.f32 %v1057, %v1073
        %v1076 = vadd.f32 %v1058, %v1074
        %v1077 = vadd.f32 %v1054, %v1070
        %v1078 = vadd.f32 %v1056, %v1072
        %v1079 = vsub.f32 %v741, %v1041
        %v1080 = vsub.f32 %v742, %v1042
        %v1081 = vmul.f32 %v1079, %v1079
        %v1082 = vmul.f32 %v1080, %v1080
        %v1083 = vsub.f32 0.0, %v1081
        %v1084 = vsub.f32 0.0, %v1082
        %v1085 = vmul.f32 %v1083, 1.442695
        %v1086 = vpow.pop %v1085
        %v1087 = vmul.f32 %v1084, 1.442695
        %v1088 = vpow.pop %v1087
        %v1089 = vmul.f32 %v1086, %v1041
        %v1090 = vmul.f32 %v1088, %v1042
        %v1091 = vadd.f32 %v1075, %v1089
        %v1092 = vadd.f32 %v1076, %v1090
        %v1093 = vadd.f32 %v1077, %v1086
        %v1094 = vadd.f32 %v1078, %v1088
        %1095 = vrot.lane.b32.xlu0 %v1041, 127
        %v1096 = vpop.permute.xlu0 %1095
        %1097 = vrot.lane.b32.xlu0 %v1042, 127
        %v1098 = vpop.permute.xlu0 %1097
        %v1099 = vsub.f32 %v741, %v1096
        %v1100 = vsub.f32 %v742, %v1098
        %v1101 = vmul.f32 %v1099, %v1099
        %v1102 = vmul.f32 %v1100, %v1100
        %v1103 = vsub.f32 %v217, %v1101
        %v1104 = vsub.f32 %v217, %v1102
        %v1105 = vmul.f32 %v1103, 1.442695
        %v1106 = vpow.pop %v1105
        %v1107 = vmul.f32 %v1104, 1.442695
        %v1108 = vpow.pop %v1107
        %v1109 = vmul.f32 %v1106, %v1096
        %v1110 = vmul.f32 %v1108, %v1098
        %v1111 = vadd.f32 %v1091, %v1109
        %v1112 = vadd.f32 %v1092, %v1110
        %v1113 = vadd.f32 %v1093, %v1106
        %v1114 = vadd.f32 %v1094, %v1108
        %1115 = vrot.lane.b32.xlu0 %v1041, 126
        %v1116 = vpop.permute.xlu0 %1115
        %1117 = vrot.lane.b32.xlu0 %v1042, 126
        %v1118 = vpop.permute.xlu0 %1117
        %v1119 = vsub.f32 %v741, %v1116
        %v1120 = vsub.f32 %v742, %v1118
        %v1121 = vmul.f32 %v1119, %v1119
        %v1122 = vmul.f32 %v1120, %v1120
        %v1123 = vsub.f32 %v222, %v1121
        %v1124 = vsub.f32 %v222, %v1122
        %v1125 = vmul.f32 %v1123, 1.442695
        %v1126 = vpow.pop %v1125
        %v1127 = vmul.f32 %v1124, 1.442695
        %v1128 = vpow.pop %v1127
        %v1129 = vmul.f32 %v1126, %v1116
        %v1130 = vmul.f32 %v1128, %v1118
        %v1131 = vadd.f32 %v1111, %v1129
        %v1132 = vadd.f32 %v1112, %v1130
        %v1133 = vadd.f32 %v1113, %v1126
        %v1134 = vadd.f32 %v1114, %v1128
        %v1135 = vmul.f32 %v191, %v1131
        %v1136 = vmul.f32 %v192, %v1132
        %v1137 = vmul.f32 %v191, %v1133
        %v1138 = vmul.f32 %v192, %v1134
        %v1139 = vrot.slane %v741, 2
        %v1140 = vrot.slane %v742, 2
        %v1141 = vsel %vm624, %v1139, %v1140
        %v1142 = vsel %vm624, %v1140, %v1139
        %1143 = vrot.lane.b32.xlu0 %v1141, 2
        %v1144 = vpop.permute.xlu0 %1143
        %1145 = vrot.lane.b32.xlu0 %v1142, 2
        %v1146 = vpop.permute.xlu0 %1145
        %v1147 = vsub.f32 %v741, %v1144
        %v1148 = vsub.f32 %v742, %v1146
        %v1149 = vmul.f32 %v1147, %v1147
        %v1150 = vmul.f32 %v1148, %v1148
        %v1151 = vsub.f32 %v207, %v1149
        %v1152 = vsub.f32 %v207, %v1150
        %v1153 = vmul.f32 %v1151, 1.442695
        %v1154 = vpow.pop %v1153
        %v1155 = vmul.f32 %v1152, 1.442695
        %v1156 = vpow.pop %v1155
        %v1157 = vmul.f32 %v1154, %v1144
        %v1158 = vmul.f32 %v1156, %v1146
        %1159 = vrot.lane.b32.xlu0 %v1141, 1
        %v1160 = vpop.permute.xlu0 %1159
        %1161 = vrot.lane.b32.xlu0 %v1142, 1
        %v1162 = vpop.permute.xlu0 %1161
        %v1163 = vsub.f32 %v741, %v1160
        %v1164 = vsub.f32 %v742, %v1162
        %v1165 = vmul.f32 %v1163, %v1163
        %v1166 = vmul.f32 %v1164, %v1164
        %v1167 = vsub.f32 %v212, %v1165
        %v1168 = vsub.f32 %v212, %v1166
        %v1169 = vmul.f32 %v1167, 1.442695
        %v1170 = vpow.pop %v1169
        %v1171 = vmul.f32 %v1168, 1.442695
        %v1172 = vpow.pop %v1171
        %v1173 = vmul.f32 %v1170, %v1160
        %v1174 = vmul.f32 %v1172, %v1162
        %v1175 = vadd.f32 %v1157, %v1173
        %v1176 = vadd.f32 %v1158, %v1174
        %v1177 = vadd.f32 %v1154, %v1170
        %v1178 = vadd.f32 %v1156, %v1172
        %v1179 = vsub.f32 %v741, %v1141
        %v1180 = vsub.f32 %v742, %v1142
        %v1181 = vmul.f32 %v1179, %v1179
        %v1182 = vmul.f32 %v1180, %v1180
        %v1183 = vsub.f32 0.0, %v1181
        %v1184 = vsub.f32 0.0, %v1182
        %v1185 = vmul.f32 %v1183, 1.442695
        %v1186 = vpow.pop %v1185
        %v1187 = vmul.f32 %v1184, 1.442695
        %v1188 = vpow.pop %v1187
        %v1189 = vmul.f32 %v1186, %v1141
        %v1190 = vmul.f32 %v1188, %v1142
        %v1191 = vadd.f32 %v1175, %v1189
        %v1192 = vadd.f32 %v1176, %v1190
        %v1193 = vadd.f32 %v1177, %v1186
        %v1194 = vadd.f32 %v1178, %v1188
        %1195 = vrot.lane.b32.xlu0 %v1141, 127
        %v1196 = vpop.permute.xlu0 %1195
        %1197 = vrot.lane.b32.xlu0 %v1142, 127
        %v1198 = vpop.permute.xlu0 %1197
        %v1199 = vsub.f32 %v741, %v1196
        %v1200 = vsub.f32 %v742, %v1198
        %v1201 = vmul.f32 %v1199, %v1199
        %v1202 = vmul.f32 %v1200, %v1200
        %v1203 = vsub.f32 %v217, %v1201
        %v1204 = vsub.f32 %v217, %v1202
        %v1205 = vmul.f32 %v1203, 1.442695
        %v1206 = vpow.pop %v1205
        %v1207 = vmul.f32 %v1204, 1.442695
        %v1208 = vpow.pop %v1207
        %v1209 = vmul.f32 %v1206, %v1196
        %v1210 = vmul.f32 %v1208, %v1198
        %v1211 = vadd.f32 %v1191, %v1209
        %v1212 = vadd.f32 %v1192, %v1210
        %v1213 = vadd.f32 %v1193, %v1206
        %v1214 = vadd.f32 %v1194, %v1208
        %1215 = vrot.lane.b32.xlu0 %v1141, 126
        %v1216 = vpop.permute.xlu0 %1215
        %1217 = vrot.lane.b32.xlu0 %v1142, 126
        %v1218 = vpop.permute.xlu0 %1217
        %v1219 = vsub.f32 %v741, %v1216
        %v1220 = vsub.f32 %v742, %v1218
        %v1221 = vmul.f32 %v1219, %v1219
        %v1222 = vmul.f32 %v1220, %v1220
        %v1223 = vsub.f32 %v222, %v1221
        %v1224 = vsub.f32 %v222, %v1222
        %v1225 = vmul.f32 %v1223, 1.442695
        %v1226 = vpow.pop %v1225
        %v1227 = vmul.f32 %v1224, 1.442695
        %v1228 = vpow.pop %v1227
        %v1229 = vmul.f32 %v1226, %v1216
        %v1230 = vmul.f32 %v1228, %v1218
        %v1231 = vadd.f32 %v1211, %v1229
        %v1232 = vadd.f32 %v1212, %v1230
        %v1233 = vadd.f32 %v1213, %v1226
        %v1234 = vadd.f32 %v1214, %v1228
        %v1235 = vmul.f32 %v201, %v1231
        %v1236 = vmul.f32 %v202, %v1232
        %v1237 = vmul.f32 %v201, %v1233
        %v1238 = vmul.f32 %v202, %v1234
        %v1239 = vadd.f32 %v839, %v939
        %v1240 = vadd.f32 %v840, %v940
        %v1241 = vadd.f32 %v1035, %v1135
        %v1242 = vadd.f32 %v1036, %v1136
        %v1243 = vadd.f32 %v1239, %v1241
        %v1244 = vadd.f32 %v1240, %v1242
        %v1245 = vadd.f32 %v1243, %v1235
        %v1246 = vadd.f32 %v1244, %v1236
        %v1247 = vadd.f32 %v841, %v941
        %v1248 = vadd.f32 %v842, %v942
        %v1249 = vadd.f32 %v1037, %v1137
        %v1250 = vadd.f32 %v1038, %v1138
        %v1251 = vadd.f32 %v1247, %v1249
        %v1252 = vadd.f32 %v1248, %v1250
        %v1253 = vadd.f32 %v1251, %v1237
        %v1254 = vadd.f32 %v1252, %v1238
        %v1255 = vrcp.pop %v1253
        %v1256 = vrcp.pop %v1254
        %v1257 = vmul.f32 %v1245, %v1255
        %v1258 = vmul.f32 %v1246, %v1256
        %v1259 = vrot.slane %v1257, 6
        %v1260 = vrot.slane %v1258, 6
        %v1261 = vsel %vm225, %v1259, %v1260
        %v1262 = vsel %vm225, %v1260, %v1259
        %1263 = vrot.lane.b32.xlu0 %v1262, 2
        %v1264 = vpop.permute.xlu0 %1263
        %1265 = vrot.lane.b32.xlu0 %v1261, 2
        %v1266 = vpop.permute.xlu0 %1265
        %v1267 = vsub.f32 %v1257, %v1264
        %v1268 = vsub.f32 %v1258, %v1266
        %v1269 = vmul.f32 %v1267, %v1267
        %v1270 = vmul.f32 %v1268, %v1268
        %v1271 = vsub.f32 %v207, %v1269
        %v1272 = vsub.f32 %v207, %v1270
        %v1273 = vmul.f32 %v1271, 1.442695
        %v1274 = vpow.pop %v1273
        %v1275 = vmul.f32 %v1272, 1.442695
        %v1276 = vpow.pop %v1275
        %v1277 = vmul.f32 %v1274, %v1264
        %v1278 = vmul.f32 %v1276, %v1266
        %1279 = vrot.lane.b32.xlu0 %v1262, 1
        %v1280 = vpop.permute.xlu0 %1279
        %1281 = vrot.lane.b32.xlu0 %v1261, 1
        %v1282 = vpop.permute.xlu0 %1281
        %v1283 = vsub.f32 %v1257, %v1280
        %v1284 = vsub.f32 %v1258, %v1282
        %v1285 = vmul.f32 %v1283, %v1283
        %v1286 = vmul.f32 %v1284, %v1284
        %v1287 = vsub.f32 %v212, %v1285
        %v1288 = vsub.f32 %v212, %v1286
        %v1289 = vmul.f32 %v1287, 1.442695
        %v1290 = vpow.pop %v1289
        %v1291 = vmul.f32 %v1288, 1.442695
        %v1292 = vpow.pop %v1291
        %v1293 = vmul.f32 %v1290, %v1280
        %v1294 = vmul.f32 %v1292, %v1282
        %v1295 = vadd.f32 %v1277, %v1293
        %v1296 = vadd.f32 %v1278, %v1294
        %v1297 = vadd.f32 %v1274, %v1290
        %v1298 = vadd.f32 %v1276, %v1292
        %v1299 = vsub.f32 %v1257, %v1262
        %v1300 = vsub.f32 %v1258, %v1261
        %v1301 = vmul.f32 %v1299, %v1299
        %v1302 = vmul.f32 %v1300, %v1300
        %v1303 = vsub.f32 0.0, %v1301
        %v1304 = vsub.f32 0.0, %v1302
        %v1305 = vmul.f32 %v1303, 1.442695
        %v1306 = vpow.pop %v1305
        %v1307 = vmul.f32 %v1304, 1.442695
        %v1308 = vpow.pop %v1307
        %v1309 = vmul.f32 %v1306, %v1262
        %v1310 = vmul.f32 %v1308, %v1261
        %v1311 = vadd.f32 %v1295, %v1309
        %v1312 = vadd.f32 %v1296, %v1310
        %v1313 = vadd.f32 %v1297, %v1306
        %v1314 = vadd.f32 %v1298, %v1308
        %1315 = vrot.lane.b32.xlu0 %v1262, 127
        %v1316 = vpop.permute.xlu0 %1315
        %1317 = vrot.lane.b32.xlu0 %v1261, 127
        %v1318 = vpop.permute.xlu0 %1317
        %v1319 = vsub.f32 %v1257, %v1316
        %v1320 = vsub.f32 %v1258, %v1318
        %v1321 = vmul.f32 %v1319, %v1319
        %v1322 = vmul.f32 %v1320, %v1320
        %v1323 = vsub.f32 %v217, %v1321
        %v1324 = vsub.f32 %v217, %v1322
        %v1325 = vmul.f32 %v1323, 1.442695
        %v1326 = vpow.pop %v1325
        %v1327 = vmul.f32 %v1324, 1.442695
        %v1328 = vpow.pop %v1327
        %v1329 = vmul.f32 %v1326, %v1316
        %v1330 = vmul.f32 %v1328, %v1318
        %v1331 = vadd.f32 %v1311, %v1329
        %v1332 = vadd.f32 %v1312, %v1330
        %v1333 = vadd.f32 %v1313, %v1326
        %v1334 = vadd.f32 %v1314, %v1328
        %1335 = vrot.lane.b32.xlu0 %v1262, 126
        %v1336 = vpop.permute.xlu0 %1335
        %1337 = vrot.lane.b32.xlu0 %v1261, 126
        %v1338 = vpop.permute.xlu0 %1337
        %v1339 = vsub.f32 %v1257, %v1336
        %v1340 = vsub.f32 %v1258, %v1338
        %v1341 = vmul.f32 %v1339, %v1339
        %v1342 = vmul.f32 %v1340, %v1340
        %v1343 = vsub.f32 %v222, %v1341
        %v1344 = vsub.f32 %v222, %v1342
        %v1345 = vmul.f32 %v1343, 1.442695
        %v1346 = vpow.pop %v1345
        %v1347 = vmul.f32 %v1344, 1.442695
        %v1348 = vpow.pop %v1347
        %v1349 = vmul.f32 %v1346, %v1336
        %v1350 = vmul.f32 %v1348, %v1338
        %v1351 = vadd.f32 %v1331, %v1349
        %v1352 = vadd.f32 %v1332, %v1350
        %v1353 = vadd.f32 %v1333, %v1346
        %v1354 = vadd.f32 %v1334, %v1348
        %v1355 = vmul.f32 %v163, %v1351
        %v1356 = vmul.f32 %v164, %v1352
        %v1357 = vmul.f32 %v163, %v1353
        %v1358 = vmul.f32 %v164, %v1354
        %v1359 = vrot.slane %v1257, 7
        %v1360 = vrot.slane %v1258, 7
        %v1361 = vsel %vm326, %v1359, %v1360
        %v1362 = vsel %vm326, %v1360, %v1359
        %1363 = vrot.lane.b32.xlu0 %v1362, 2
        %v1364 = vpop.permute.xlu0 %1363
        %1365 = vrot.lane.b32.xlu0 %v1361, 2
        %v1366 = vpop.permute.xlu0 %1365
        %v1367 = vsub.f32 %v1257, %v1364
        %v1368 = vsub.f32 %v1258, %v1366
        %v1369 = vmul.f32 %v1367, %v1367
        %v1370 = vmul.f32 %v1368, %v1368
        %v1371 = vsub.f32 %v207, %v1369
        %v1372 = vsub.f32 %v207, %v1370
        %v1373 = vmul.f32 %v1371, 1.442695
        %v1374 = vpow.pop %v1373
        %v1375 = vmul.f32 %v1372, 1.442695
        %v1376 = vpow.pop %v1375
        %v1377 = vmul.f32 %v1374, %v1364
        %v1378 = vmul.f32 %v1376, %v1366
        %1379 = vrot.lane.b32.xlu0 %v1362, 1
        %v1380 = vpop.permute.xlu0 %1379
        %1381 = vrot.lane.b32.xlu0 %v1361, 1
        %v1382 = vpop.permute.xlu0 %1381
        %v1383 = vsub.f32 %v1257, %v1380
        %v1384 = vsub.f32 %v1258, %v1382
        %v1385 = vmul.f32 %v1383, %v1383
        %v1386 = vmul.f32 %v1384, %v1384
        %v1387 = vsub.f32 %v212, %v1385
        %v1388 = vsub.f32 %v212, %v1386
        %v1389 = vmul.f32 %v1387, 1.442695
        %v1390 = vpow.pop %v1389
        %v1391 = vmul.f32 %v1388, 1.442695
        %v1392 = vpow.pop %v1391
        %v1393 = vmul.f32 %v1390, %v1380
        %v1394 = vmul.f32 %v1392, %v1382
        %v1395 = vadd.f32 %v1377, %v1393
        %v1396 = vadd.f32 %v1378, %v1394
        %v1397 = vadd.f32 %v1374, %v1390
        %v1398 = vadd.f32 %v1376, %v1392
        %v1399 = vsub.f32 %v1257, %v1362
        %v1400 = vsub.f32 %v1258, %v1361
        %v1401 = vmul.f32 %v1399, %v1399
        %v1402 = vmul.f32 %v1400, %v1400
        %v1403 = vsub.f32 0.0, %v1401
        %v1404 = vsub.f32 0.0, %v1402
        %v1405 = vmul.f32 %v1403, 1.442695
        %v1406 = vpow.pop %v1405
        %v1407 = vmul.f32 %v1404, 1.442695
        %v1408 = vpow.pop %v1407
        %v1409 = vmul.f32 %v1406, %v1362
        %v1410 = vmul.f32 %v1408, %v1361
        %v1411 = vadd.f32 %v1395, %v1409
        %v1412 = vadd.f32 %v1396, %v1410
        %v1413 = vadd.f32 %v1397, %v1406
        %v1414 = vadd.f32 %v1398, %v1408
        %1415 = vrot.lane.b32.xlu0 %v1362, 127
        %v1416 = vpop.permute.xlu0 %1415
        %1417 = vrot.lane.b32.xlu0 %v1361, 127
        %v1418 = vpop.permute.xlu0 %1417
        %v1419 = vsub.f32 %v1257, %v1416
        %v1420 = vsub.f32 %v1258, %v1418
        %v1421 = vmul.f32 %v1419, %v1419
        %v1422 = vmul.f32 %v1420, %v1420
        %v1423 = vsub.f32 %v217, %v1421
        %v1424 = vsub.f32 %v217, %v1422
        %v1425 = vmul.f32 %v1423, 1.442695
        %v1426 = vpow.pop %v1425
        %v1427 = vmul.f32 %v1424, 1.442695
        %v1428 = vpow.pop %v1427
        %v1429 = vmul.f32 %v1426, %v1416
        %v1430 = vmul.f32 %v1428, %v1418
        %v1431 = vadd.f32 %v1411, %v1429
        %v1432 = vadd.f32 %v1412, %v1430
        %v1433 = vadd.f32 %v1413, %v1426
        %v1434 = vadd.f32 %v1414, %v1428
        %1435 = vrot.lane.b32.xlu0 %v1362, 126
        %v1436 = vpop.permute.xlu0 %1435
        %1437 = vrot.lane.b32.xlu0 %v1361, 126
        %v1438 = vpop.permute.xlu0 %1437
        %v1439 = vsub.f32 %v1257, %v1436
        %v1440 = vsub.f32 %v1258, %v1438
        %v1441 = vmul.f32 %v1439, %v1439
        %v1442 = vmul.f32 %v1440, %v1440
        %v1443 = vsub.f32 %v222, %v1441
        %v1444 = vsub.f32 %v222, %v1442
        %v1445 = vmul.f32 %v1443, 1.442695
        %v1446 = vpow.pop %v1445
        %v1447 = vmul.f32 %v1444, 1.442695
        %v1448 = vpow.pop %v1447
        %v1449 = vmul.f32 %v1446, %v1436
        %v1450 = vmul.f32 %v1448, %v1438
        %v1451 = vadd.f32 %v1431, %v1449
        %v1452 = vadd.f32 %v1432, %v1450
        %v1453 = vadd.f32 %v1433, %v1446
        %v1454 = vadd.f32 %v1434, %v1448
        %v1455 = vmul.f32 %v173, %v1451
        %v1456 = vmul.f32 %v174, %v1452
        %v1457 = vmul.f32 %v173, %v1453
        %v1458 = vmul.f32 %v174, %v1454
        %1459 = vrot.lane.b32.xlu0 %v1257, 2
        %v1460 = vpop.permute.xlu0 %1459
        %1461 = vrot.lane.b32.xlu0 %v1258, 2
        %v1462 = vpop.permute.xlu0 %1461
        %v1463 = vsub.f32 %v1257, %v1460
        %v1464 = vsub.f32 %v1258, %v1462
        %v1465 = vmul.f32 %v1463, %v1463
        %v1466 = vmul.f32 %v1464, %v1464
        %v1467 = vsub.f32 %v207, %v1465
        %v1468 = vsub.f32 %v207, %v1466
        %v1469 = vmul.f32 %v1467, 1.442695
        %v1470 = vpow.pop %v1469
        %v1471 = vmul.f32 %v1468, 1.442695
        %v1472 = vpow.pop %v1471
        %v1473 = vmul.f32 %v1470, %v1460
        %v1474 = vmul.f32 %v1472, %v1462
        %1475 = vrot.lane.b32.xlu0 %v1257, 1
        %v1476 = vpop.permute.xlu0 %1475
        %1477 = vrot.lane.b32.xlu0 %v1258, 1
        %v1478 = vpop.permute.xlu0 %1477
        %v1479 = vsub.f32 %v1257, %v1476
        %v1480 = vsub.f32 %v1258, %v1478
        %v1481 = vmul.f32 %v1479, %v1479
        %v1482 = vmul.f32 %v1480, %v1480
        %v1483 = vsub.f32 %v212, %v1481
        %v1484 = vsub.f32 %v212, %v1482
        %v1485 = vmul.f32 %v1483, 1.442695
        %v1486 = vpow.pop %v1485
        %v1487 = vmul.f32 %v1484, 1.442695
        %v1488 = vpow.pop %v1487
        %v1489 = vmul.f32 %v1486, %v1476
        %v1490 = vmul.f32 %v1488, %v1478
        %v1491 = vadd.f32 %v1473, %v1489
        %v1492 = vadd.f32 %v1474, %v1490
        %v1493 = vadd.f32 %v1470, %v1486
        %v1494 = vadd.f32 %v1472, %v1488
        %v1495 = vsub.f32 %v1257, %v1257
        %v1496 = vsub.f32 %v1258, %v1258
        %v1497 = vmul.f32 %v1495, %v1495
        %v1498 = vmul.f32 %v1496, %v1496
        %v1499 = vsub.f32 0.0, %v1497
        %v1500 = vsub.f32 0.0, %v1498
        %v1501 = vmul.f32 %v1499, 1.442695
        %v1502 = vpow.pop %v1501
        %v1503 = vmul.f32 %v1500, 1.442695
        %v1504 = vpow.pop %v1503
        %v1505 = vmul.f32 %v1502, %v1257
        %v1506 = vmul.f32 %v1504, %v1258
        %v1507 = vadd.f32 %v1491, %v1505
        %v1508 = vadd.f32 %v1492, %v1506
        %v1509 = vadd.f32 %v1493, %v1502
        %v1510 = vadd.f32 %v1494, %v1504
        %1511 = vrot.lane.b32.xlu0 %v1257, 127
        %v1512 = vpop.permute.xlu0 %1511
        %1513 = vrot.lane.b32.xlu0 %v1258, 127
        %v1514 = vpop.permute.xlu0 %1513
        %v1515 = vsub.f32 %v1257, %v1512
        %v1516 = vsub.f32 %v1258, %v1514
        %v1517 = vmul.f32 %v1515, %v1515
        %v1518 = vmul.f32 %v1516, %v1516
        %v1519 = vsub.f32 %v217, %v1517
        %v1520 = vsub.f32 %v217, %v1518
        %v1521 = vmul.f32 %v1519, 1.442695
        %v1522 = vpow.pop %v1521
        %v1523 = vmul.f32 %v1520, 1.442695
        %v1524 = vpow.pop %v1523
        %v1525 = vmul.f32 %v1522, %v1512
        %v1526 = vmul.f32 %v1524, %v1514
        %v1527 = vadd.f32 %v1507, %v1525
        %v1528 = vadd.f32 %v1508, %v1526
        %v1529 = vadd.f32 %v1509, %v1522
        %v1530 = vadd.f32 %v1510, %v1524
        %1531 = vrot.lane.b32.xlu0 %v1257, 126
        %v1532 = vpop.permute.xlu0 %1531
        %1533 = vrot.lane.b32.xlu0 %v1258, 126
        %v1534 = vpop.permute.xlu0 %1533
        %v1535 = vsub.f32 %v1257, %v1532
        %v1536 = vsub.f32 %v1258, %v1534
        %v1537 = vmul.f32 %v1535, %v1535
        %v1538 = vmul.f32 %v1536, %v1536
        %v1539 = vsub.f32 %v222, %v1537
        %v1540 = vsub.f32 %v222, %v1538
        %v1541 = vmul.f32 %v1539, 1.442695
        %v1542 = vpow.pop %v1541
        %v1543 = vmul.f32 %v1540, 1.442695
        %v1544 = vpow.pop %v1543
        %v1545 = vmul.f32 %v1542, %v1532
        %v1546 = vmul.f32 %v1544, %v1534
        %v1547 = vadd.f32 %v1527, %v1545
        %v1548 = vadd.f32 %v1528, %v1546
        %v1549 = vadd.f32 %v1529, %v1542
        %v1550 = vadd.f32 %v1530, %v1544
        %v1551 = vmul.f32 %v181, %v1547
        %v1552 = vmul.f32 %v182, %v1548
        %v1553 = vmul.f32 %v181, %v1549
        %v1554 = vmul.f32 %v182, %v1550
        %v1555 = vrot.slane %v1257, 1
        %v1556 = vrot.slane %v1258, 1
        %v1557 = vsel %vm523, %v1555, %v1556
        %v1558 = vsel %vm523, %v1556, %v1555
        %1559 = vrot.lane.b32.xlu0 %v1557, 2
        %v1560 = vpop.permute.xlu0 %1559
        %1561 = vrot.lane.b32.xlu0 %v1558, 2
        %v1562 = vpop.permute.xlu0 %1561
        %v1563 = vsub.f32 %v1257, %v1560
        %v1564 = vsub.f32 %v1258, %v1562
        %v1565 = vmul.f32 %v1563, %v1563
        %v1566 = vmul.f32 %v1564, %v1564
        %v1567 = vsub.f32 %v207, %v1565
        %v1568 = vsub.f32 %v207, %v1566
        %v1569 = vmul.f32 %v1567, 1.442695
        %v1570 = vpow.pop %v1569
        %v1571 = vmul.f32 %v1568, 1.442695
        %v1572 = vpow.pop %v1571
        %v1573 = vmul.f32 %v1570, %v1560
        %v1574 = vmul.f32 %v1572, %v1562
        %1575 = vrot.lane.b32.xlu0 %v1557, 1
        %v1576 = vpop.permute.xlu0 %1575
        %1577 = vrot.lane.b32.xlu0 %v1558, 1
        %v1578 = vpop.permute.xlu0 %1577
        %v1579 = vsub.f32 %v1257, %v1576
        %v1580 = vsub.f32 %v1258, %v1578
        %v1581 = vmul.f32 %v1579, %v1579
        %v1582 = vmul.f32 %v1580, %v1580
        %v1583 = vsub.f32 %v212, %v1581
        %v1584 = vsub.f32 %v212, %v1582
        %v1585 = vmul.f32 %v1583, 1.442695
        %v1586 = vpow.pop %v1585
        %v1587 = vmul.f32 %v1584, 1.442695
        %v1588 = vpow.pop %v1587
        %v1589 = vmul.f32 %v1586, %v1576
        %v1590 = vmul.f32 %v1588, %v1578
        %v1591 = vadd.f32 %v1573, %v1589
        %v1592 = vadd.f32 %v1574, %v1590
        %v1593 = vadd.f32 %v1570, %v1586
        %v1594 = vadd.f32 %v1572, %v1588
        %v1595 = vsub.f32 %v1257, %v1557
        %v1596 = vsub.f32 %v1258, %v1558
        %v1597 = vmul.f32 %v1595, %v1595
        %v1598 = vmul.f32 %v1596, %v1596
        %v1599 = vsub.f32 0.0, %v1597
        %v1600 = vsub.f32 0.0, %v1598
        %v1601 = vmul.f32 %v1599, 1.442695
        %v1602 = vpow.pop %v1601
        %v1603 = vmul.f32 %v1600, 1.442695
        %v1604 = vpow.pop %v1603
        %v1605 = vmul.f32 %v1602, %v1557
        %v1606 = vmul.f32 %v1604, %v1558
        %v1607 = vadd.f32 %v1591, %v1605
        %v1608 = vadd.f32 %v1592, %v1606
        %v1609 = vadd.f32 %v1593, %v1602
        %v1610 = vadd.f32 %v1594, %v1604
        %1611 = vrot.lane.b32.xlu0 %v1557, 127
        %v1612 = vpop.permute.xlu0 %1611
        %1613 = vrot.lane.b32.xlu0 %v1558, 127
        %v1614 = vpop.permute.xlu0 %1613
        %v1615 = vsub.f32 %v1257, %v1612
        %v1616 = vsub.f32 %v1258, %v1614
        %v1617 = vmul.f32 %v1615, %v1615
        %v1618 = vmul.f32 %v1616, %v1616
        %v1619 = vsub.f32 %v217, %v1617
        %v1620 = vsub.f32 %v217, %v1618
        %v1621 = vmul.f32 %v1619, 1.442695
        %v1622 = vpow.pop %v1621
        %v1623 = vmul.f32 %v1620, 1.442695
        %v1624 = vpow.pop %v1623
        %v1625 = vmul.f32 %v1622, %v1612
        %v1626 = vmul.f32 %v1624, %v1614
        %v1627 = vadd.f32 %v1607, %v1625
        %v1628 = vadd.f32 %v1608, %v1626
        %v1629 = vadd.f32 %v1609, %v1622
        %v1630 = vadd.f32 %v1610, %v1624
        %1631 = vrot.lane.b32.xlu0 %v1557, 126
        %v1632 = vpop.permute.xlu0 %1631
        %1633 = vrot.lane.b32.xlu0 %v1558, 126
        %v1634 = vpop.permute.xlu0 %1633
        %v1635 = vsub.f32 %v1257, %v1632
        %v1636 = vsub.f32 %v1258, %v1634
        %v1637 = vmul.f32 %v1635, %v1635
        %v1638 = vmul.f32 %v1636, %v1636
        %v1639 = vsub.f32 %v222, %v1637
        %v1640 = vsub.f32 %v222, %v1638
        %v1641 = vmul.f32 %v1639, 1.442695
        %v1642 = vpow.pop %v1641
        %v1643 = vmul.f32 %v1640, 1.442695
        %v1644 = vpow.pop %v1643
        %v1645 = vmul.f32 %v1642, %v1632
        %v1646 = vmul.f32 %v1644, %v1634
        %v1647 = vadd.f32 %v1627, %v1645
        %v1648 = vadd.f32 %v1628, %v1646
        %v1649 = vadd.f32 %v1629, %v1642
        %v1650 = vadd.f32 %v1630, %v1644
        %v1651 = vmul.f32 %v191, %v1647
        %v1652 = vmul.f32 %v192, %v1648
        %v1653 = vmul.f32 %v191, %v1649
        %v1654 = vmul.f32 %v192, %v1650
        %v1655 = vrot.slane %v1257, 2
        %v1656 = vrot.slane %v1258, 2
        %v1657 = vsel %vm624, %v1655, %v1656
        %v1658 = vsel %vm624, %v1656, %v1655
        %1659 = vrot.lane.b32.xlu0 %v1657, 2
        %v1660 = vpop.permute.xlu0 %1659
        %1661 = vrot.lane.b32.xlu0 %v1658, 2
        %v1662 = vpop.permute.xlu0 %1661
        %v1663 = vsub.f32 %v1257, %v1660
        %v1664 = vsub.f32 %v1258, %v1662
        %v1665 = vmul.f32 %v1663, %v1663
        %v1666 = vmul.f32 %v1664, %v1664
        %v1667 = vsub.f32 %v207, %v1665
        %v1668 = vsub.f32 %v207, %v1666
        %v1669 = vmul.f32 %v1667, 1.442695
        %v1670 = vpow.pop %v1669
        %v1671 = vmul.f32 %v1668, 1.442695
        %v1672 = vpow.pop %v1671
        %v1673 = vmul.f32 %v1670, %v1660
        %v1674 = vmul.f32 %v1672, %v1662
        %1675 = vrot.lane.b32.xlu0 %v1657, 1
        %v1676 = vpop.permute.xlu0 %1675
        %1677 = vrot.lane.b32.xlu0 %v1658, 1
        %v1678 = vpop.permute.xlu0 %1677
        %v1679 = vsub.f32 %v1257, %v1676
        %v1680 = vsub.f32 %v1258, %v1678
        %v1681 = vmul.f32 %v1679, %v1679
        %v1682 = vmul.f32 %v1680, %v1680
        %v1683 = vsub.f32 %v212, %v1681
        %v1684 = vsub.f32 %v212, %v1682
        %v1685 = vmul.f32 %v1683, 1.442695
        %v1686 = vpow.pop %v1685
        %v1687 = vmul.f32 %v1684, 1.442695
        %v1688 = vpow.pop %v1687
        %v1689 = vmul.f32 %v1686, %v1676
        %v1690 = vmul.f32 %v1688, %v1678
        %v1691 = vadd.f32 %v1673, %v1689
        %v1692 = vadd.f32 %v1674, %v1690
        %v1693 = vadd.f32 %v1670, %v1686
        %v1694 = vadd.f32 %v1672, %v1688
        %v1695 = vsub.f32 %v1257, %v1657
        %v1696 = vsub.f32 %v1258, %v1658
        %v1697 = vmul.f32 %v1695, %v1695
        %v1698 = vmul.f32 %v1696, %v1696
        %v1699 = vsub.f32 0.0, %v1697
        %v1700 = vsub.f32 0.0, %v1698
        %v1701 = vmul.f32 %v1699, 1.442695
        %v1702 = vpow.pop %v1701
        %v1703 = vmul.f32 %v1700, 1.442695
        %v1704 = vpow.pop %v1703
        %v1705 = vmul.f32 %v1702, %v1657
        %v1706 = vmul.f32 %v1704, %v1658
        %v1707 = vadd.f32 %v1691, %v1705
        %v1708 = vadd.f32 %v1692, %v1706
        %v1709 = vadd.f32 %v1693, %v1702
        %v1710 = vadd.f32 %v1694, %v1704
        %1711 = vrot.lane.b32.xlu0 %v1657, 127
        %v1712 = vpop.permute.xlu0 %1711
        %1713 = vrot.lane.b32.xlu0 %v1658, 127
        %v1714 = vpop.permute.xlu0 %1713
        %v1715 = vsub.f32 %v1257, %v1712
        %v1716 = vsub.f32 %v1258, %v1714
        %v1717 = vmul.f32 %v1715, %v1715
        %v1718 = vmul.f32 %v1716, %v1716
        %v1719 = vsub.f32 %v217, %v1717
        %v1720 = vsub.f32 %v217, %v1718
        %v1721 = vmul.f32 %v1719, 1.442695
        %v1722 = vpow.pop %v1721
        %v1723 = vmul.f32 %v1720, 1.442695
        %v1724 = vpow.pop %v1723
        %v1725 = vmul.f32 %v1722, %v1712
        %v1726 = vmul.f32 %v1724, %v1714
        %v1727 = vadd.f32 %v1707, %v1725
        %v1728 = vadd.f32 %v1708, %v1726
        %v1729 = vadd.f32 %v1709, %v1722
        %v1730 = vadd.f32 %v1710, %v1724
        %1731 = vrot.lane.b32.xlu0 %v1657, 126
        %v1732 = vpop.permute.xlu0 %1731
        %1733 = vrot.lane.b32.xlu0 %v1658, 126
        %v1734 = vpop.permute.xlu0 %1733
        %v1735 = vsub.f32 %v1257, %v1732
        %v1736 = vsub.f32 %v1258, %v1734
        %v1737 = vmul.f32 %v1735, %v1735
        %v1738 = vmul.f32 %v1736, %v1736
        %v1739 = vsub.f32 %v222, %v1737
        %v1740 = vsub.f32 %v222, %v1738
        %v1741 = vmul.f32 %v1739, 1.442695
        %v1742 = vpow.pop %v1741
        %v1743 = vmul.f32 %v1740, 1.442695
        %v1744 = vpow.pop %v1743
        %v1745 = vmul.f32 %v1742, %v1732
        %v1746 = vmul.f32 %v1744, %v1734
        %v1747 = vadd.f32 %v1727, %v1745
        %v1748 = vadd.f32 %v1728, %v1746
        %v1749 = vadd.f32 %v1729, %v1742
        %v1750 = vadd.f32 %v1730, %v1744
        %v1751 = vmul.f32 %v201, %v1747
        %v1752 = vmul.f32 %v202, %v1748
        %v1753 = vmul.f32 %v201, %v1749
        %v1754 = vmul.f32 %v202, %v1750
        %v1755 = vadd.f32 %v1355, %v1455
        %v1756 = vadd.f32 %v1356, %v1456
        %v1757 = vadd.f32 %v1551, %v1651
        %v1758 = vadd.f32 %v1552, %v1652
        %v1759 = vadd.f32 %v1755, %v1757
        %v1760 = vadd.f32 %v1756, %v1758
        %v1761 = vadd.f32 %v1759, %v1751
        %v1762 = vadd.f32 %v1760, %v1752
        %v1763 = vadd.f32 %v1357, %v1457
        %v1764 = vadd.f32 %v1358, %v1458
        %v1765 = vadd.f32 %v1553, %v1653
        %v1766 = vadd.f32 %v1554, %v1654
        %v1767 = vadd.f32 %v1763, %v1765
        %v1768 = vadd.f32 %v1764, %v1766
        %v1769 = vadd.f32 %v1767, %v1753
        %v1770 = vadd.f32 %v1768, %v1754
        %v1771 = vrcp.pop %v1769
        %v1772 = vrcp.pop %v1770
        %v1773 = vmul.f32 %v1761, %v1771
        %v1774 = vmul.f32 %v1762, %v1772
        %v1775 = vmul.f32 %v1773, 0.014142135
        %v1776 = vmul.f32 %v1774, 0.014142135
        %1777 = vst [vmem:[%s133] sm:$0xff] %v1775
        %1778 = vst [vmem:[%s133 + $0x8] sm:$0xff] %v1776
        %s1779 = sand.u32 %s52, 1
        %s1780 = scalar_lea.sflag [#allocation4], %s1779
        %s1781 = sand.u32 %s52, 1
        %s1782 = smul.addr %s1781, 16
        %s1783 = scalar_lea.vmem [#allocation5], %s1782
        // Predicated region
        $region29: #{tpu_custom_call.1} parent=23 // pred_check
          %p1784 = pneg %p62
        $region30: #{tpu_custom_call.1} parent=23 // pred_check_branch
          %1786 = sbr.rel (%p1784) target = $region32
        $region31: #{tpu_custom_call.1} parent=23 // pred_region
          %s1788 = ssub.s32 256, 256
          %1789 = vsyncadd %s1780, %s1788
          %s1790 = smul.addr %s18, 128
          %s1791 = scalar_lea.hbm %s1, %s1790
          %s1792 = sshll.u32 %s1783, 4
          %s1793 = int_to_ptr.vmem [resolvable:$true] %s1792
          %1798 = dma.vmem_to_hbm [thread:$0]  %s1793, 256, %s1791, %s1780, 128, 256, 8
        $region32: #{tpu_custom_call.1} parent=23 // pred_fallthru
          _
      $region24: #{tpu_custom_call.1} parent=5 // pred_fallthru
        _
      %p1799 = scmp.le.s32.totalorder 2, %s13
      // Predicated region
      $region33: #{tpu_custom_call.1} parent=5 // pred_check
        %p1800 = pneg %p1799
      $region34: #{tpu_custom_call.1} parent=5 // pred_check_branch
        %1802 = sbr.rel (%p1800) target = $region36
      $region35: #{tpu_custom_call.1} parent=5 // pred_region
        %s1803 = ssub.s32 %s13, 2
        // Predicated region
        $region37: #{tpu_custom_call.1} parent=35 // pred_check
          %p1804 = pneg %p68
        $region38: #{tpu_custom_call.1} parent=35 // pred_check_branch
          %1806 = sbr.rel (%p1804) target = $region40
        $region39: #{tpu_custom_call.1} parent=35 // pred_region
          %s1807 = sand.u32 %s53, 1
          %s1808 = scalar_lea.sflag [#allocation4], %s1807
          %s1809 = sand.u32 %s53, 1
          %s1810 = smul.addr %s1809, 16
          %s1811 = scalar_lea.vmem [#allocation5], %s1810
          %1812 = dma.done %s1808, 256
        $region40: #{tpu_custom_call.1} parent=35 // pred_fallthru
          _
      $region36: #{tpu_custom_call.1} parent=5 // pred_fallthru
        _
    $region6: #{tpu_custom_call.1} parent=1 // loop_footer
      %s17 = sadd.s32 1, %s13
    $region7: #{tpu_custom_call.1} parent=1 // loop_footer_branch
      %12 = sbr.rel target = $region3
    $region8: #{tpu_custom_call.1} parent=1 // loop_exit
      _
    %1813 = vsyncpa [#allocation3], 1
    %s1814 = scalar_lea.sflag [#allocation3], 1
    %1815 = vsyncpa %s1814, 1
    %1816 = vsyncpa [#allocation4], 1
    %s1817 = scalar_lea.sflag [#allocation4], 1
    %1818 = vsyncpa %s1817, 1

</llo_original>
